<compile_context>
chip_gen: v7x
topology: tpu7x:2x2x1
jax: 0.10.0
libtpu: 0.0.40
codegen_flags: <defaults>
</compile_context>

<pallas_src>
import jax
import jax.numpy as jnp
from jax import lax
from jax.experimental import pallas as pl
from jax.experimental.pallas import tpu as pltpu


_LANE = 128
_PAD_UNIT = 512                               # ragged batches pad to <= next multiple
_TILE_LADDER = (8192, 4096, 2048, 1024, 512)  # largest first; 8192 cap is v5e-safe


def _choose_tiling(n):
    """Return (n_pad, tile).

    n_pad: n rounded up to a small lane-dense unit (128 for tiny batches,
      512 otherwise), bounding pad waste to < 512 points.
    tile:  largest ladder entry dividing n_pad that still yields >= 2 grid
      steps (megacore sharding on v7x) for large batches, capped at 8192 to
      amortize the ~0.35 us/step overhead while staying well inside VMEM.
    """
    if n <= _PAD_UNIT:
        n_pad = max(pl.cdiv(n, _LANE) * _LANE, _LANE)
        return n_pad, n_pad
    n_pad = pl.cdiv(n, _PAD_UNIT) * _PAD_UNIT
    for t in _TILE_LADDER:
        if n_pad % t == 0 and n_pad // t >= 2:
            return n_pad, t
    return n_pad, _PAD_UNIT


def pinn_kernel(x_ref, w1_ref, b1_ref, w2_ref, b2_ref, w3_ref, b3_ref, o_ref):
    """Fused 3-layer MLP in batch-on-lanes layout.

    x_ref : [d_in, tile]      w1_ref: [h1, d_in]   b1_ref: [h1, 1]
    w2_ref: [h2, h1]          b2_ref: [h2, 1]
    w3_ref: [d_out, h2]       b3_ref: [d_out, 1]
    o_ref : [d_out, tile]
    """
    x = x_ref[...]                      # [d_in, tile]
    w1 = w1_ref[...]                    # [h1, d_in]

    # Layer 1: contraction dim is tiny (d_in = 2) -> VPU broadcast-FMAs, not
    # an MXU matmul (which would pad K to the systolic depth for nothing).
    h1_pre = b1_ref[...]                # [h1, 1], broadcasts over the lane axis
    for k in range(x.shape[0]):         # unrolled at trace time (d_in = 2)
        h1_pre = h1_pre + w1[:, k:k + 1] * x[k:k + 1, :]
    h1 = jnp.tanh(h1_pre)               # [h1, tile]
    # TODO(synk): on v6e/v7x a bf16 tanh (packed-bf16 EUP, ~2x) is the only
    # remaining per-point throughput lever, but it breaks f32 1e-5 accuracy.

    # Layer 2: 32x32 contraction on the MXU.  HIGHEST = true f32 passes; the
    # MXU has enormous slack (EUP is the binding slot), so this is free and
    # keeps PINN-grade accuracy instead of the default bf16-emulated dot.
    h2 = jnp.tanh(
        jnp.dot(w2_ref[...], h1, preferred_element_type=jnp.float32,
                precision=lax.Precision.HIGHEST)
        + b2_ref[...]
    )                                   # [h2, tile]

    # Layer 3 (output head, d_out = 2).  Left on the MXU: the VPU already
    # carries ~130 ops/point, so moving this to broadcast-FMAs would just load
    # the VPU for no wall-clock gain while EUP stays the bottleneck.
    out = (
        jnp.dot(w3_ref[...], h2, preferred_element_type=jnp.float32,
                precision=lax.Precision.HIGHEST)
        + b3_ref[...]
    )                                   # [d_out, tile]

    # q, w = split(out, 1, dim=1); cat([q, w], dim=1) == out  (identity)
    o_ref[...] = out.astype(o_ref.dtype)


@jax.jit
def pinn_forward_dn(xt, params):
    """Hot-path entry: xt is [d_in, N] (batch on the 128-lane axis).

    Returns [d_out, N].  Training loops should keep activations in this layout
    end-to-end so no transpose/pad HBM round-trips surround the kernel.
    """
    (w1, b1), (w2, b2), (w3, b3) = params
    d_in, n = xt.shape
    h1d, h2d, d_out = w1.shape[0], w2.shape[0], w3.shape[0]

    n_pad, tile = _choose_tiling(n)
    if n_pad != n:
        xt = jnp.pad(xt, ((0, 0), (0, n_pad - n)))

    full = lambda arr: pl.BlockSpec(arr.shape, lambda i: (0, 0))

    cost = pl.CostEstimate(
        flops=2 * n_pad * (d_in * h1d + h1d * h2d + h2d * d_out),
        transcendentals=n_pad * (h1d + h2d),
        bytes_accessed=4 * (
            n_pad * (d_in + d_out)
            + w1.size + b1.size + w2.size + b2.size + w3.size + b3.size
        ),
    )

    out_t = pl.pallas_call(
        pinn_kernel,
        out_shape=jax.ShapeDtypeStruct((d_out, n_pad), jnp.float32),
        grid_spec=pltpu.PrefetchScalarGridSpec(
            num_scalar_prefetch=0,
            grid=(n_pad // tile,),
            in_specs=[
                pl.BlockSpec((d_in, tile), lambda i: (0, i)),  # lane-dense x tile
                full(w1), full(b1),
                full(w2), full(b2),
                full(w3), full(b3),
            ],
            out_specs=pl.BlockSpec((d_out, tile), lambda i: (0, i)),
        ),
        compiler_params=pltpu.CompilerParams(
            dimension_semantics=("parallel",),   # shards grid steps across TCs (v7x)
        ),
        cost_estimate=cost,
    )(xt, w1, b1, w2, b2, w3, b3)

    if n_pad != n:
        out_t = out_t[:, :n]
    return out_t


@jax.jit
def pinn_forward(xy, params):
    """Convenience wrapper matching the PyTorch layout: xy [N, d_in] -> [N, d_out].

    The transposes here are pure layout plumbing; prefer pinn_forward_dn in a
    training loop to avoid the extra HBM round-trips.
    """
    return pinn_forward_dn(xy.T, params).T


def init_params(key, layers):
    """Deterministic xavier_uniform weights + normal biases (matches init_weights).

    Weights kept in PyTorch-native [out, in] orientation; biases are [out, 1].
    """
    params = []
    for i in range(len(layers) - 1):
        key, kw, kb = jax.random.split(key, 3)
        fan_in, fan_out = layers[i], layers[i + 1]
        limit = jnp.sqrt(6.0 / (fan_in + fan_out))
        w = jax.random.uniform(kw, (fan_out, fan_in), jnp.float32, -limit, limit)
        b = jax.random.normal(kb, (fan_out, 1), jnp.float32)
        params.append((w, b))
    return tuple(params)


def pinn_forward_ref(xy, params):
    """Pure-JAX reference mirroring the PyTorch forward (row-major batch)."""
    h = xy
    for w, b in params[:-1]:
        h = jnp.tanh(jnp.dot(h, w.T, precision=lax.Precision.HIGHEST) + b[:, 0])
    w, b = params[-1]
    out = jnp.dot(h, w.T, precision=lax.Precision.HIGHEST) + b[:, 0]
    q, ww = out[:, 0:1], out[:, 1:2]
    return jnp.concatenate([q, ww], axis=1)


if __name__ == "__main__":
    # PINN(layers=[2, 32, 32, 2]): input (x, y) coords -> (q, w) outputs.
    layers = [2, 32, 32, 2]

    key = jax.random.PRNGKey(0)
    key, kx = jax.random.split(key)
    params = init_params(key, layers)

    # Small batch (single tile).
    n = 256
    xy = jax.random.uniform(kx, (n, layers[0]), jnp.float32)
    out = jax.block_until_ready(pinn_forward(xy, params))
    ref = pinn_forward_ref(xy, params)
    assert out.shape == (n, layers[-1]), out.shape
    assert jnp.allclose(out, ref, atol=1e-5, rtol=1e-5), "mismatch vs reference"

    # Ragged batch (not a multiple of 128) -> exercises the padding path.
    xy2 = xy[: n - 37]
    out2 = jax.block_until_ready(pinn_forward(xy2, params))
    ref2 = pinn_forward_ref(xy2, params)
    assert out2.shape == (n - 37, layers[-1]), out2.shape
    assert jnp.allclose(out2, ref2, atol=1e-5, rtol=1e-5), "ragged mismatch"

    # Multi-tile batch (>= 2 grid steps -> v7x megacore path) via the [d, N]
    # hot-path entry (no wrapper transposes): n=1000 -> n_pad=1024, tile=512.
    key, kx2 = jax.random.split(key)
    n3 = 1000
    xt3 = jax.random.uniform(kx2, (layers[0], n3), jnp.float32)
    out3 = jax.block_until_ready(pinn_forward_dn(xt3, params))
    ref3 = pinn_forward_ref(xt3.T, params)
    assert out3.shape == (layers[-1], n3), out3.shape
    assert jnp.allclose(out3.T, ref3, atol=1e-5, rtol=1e-5), "multi-tile mismatch"

    print("KERNEL_OK")
</pallas_src>

<mosaic_0001>
module attributes {stable_mosaic.version = 11 : i64} {
  func.func @pinn_kernel(%arg0: i32, %arg1: memref<2x256xf32, #tpu.memory_space<vmem>>, %arg2: memref<32x2xf32, #tpu.memory_space<vmem>>, %arg3: memref<32x1xf32, #tpu.memory_space<vmem>>, %arg4: memref<32x32xf32, #tpu.memory_space<vmem>>, %arg5: memref<32x1xf32, #tpu.memory_space<vmem>>, %arg6: memref<2x32xf32, #tpu.memory_space<vmem>>, %arg7: memref<2x1xf32, #tpu.memory_space<vmem>>, %arg8: memref<2x256xf32, #tpu.memory_space<vmem>>) attributes {dimension_semantics = [#tpu.dimension_semantics<parallel>], iteration_bounds = array<i64: 1>, scalar_prefetch = 0 : i64, scratch_operands = 0 : i64, tpu.core_type = #tpu.core_type<tc>, window_params = [{transform_indices = @transform_0, window_bounds = array<i64: 2, 256>}, {pipeline_mode = #tpu.pipeline_mode<synchronous>, transform_indices = @transform_1, window_bounds = array<i64: 32, 2>}, {pipeline_mode = #tpu.pipeline_mode<synchronous>, transform_indices = @transform_2, window_bounds = array<i64: 32, 1>}, {pipeline_mode = #tpu.pipeline_mode<synchronous>, transform_indices = @transform_3, window_bounds = array<i64: 32, 32>}, {pipeline_mode = #tpu.pipeline_mode<synchronous>, transform_indices = @transform_4, window_bounds = array<i64: 32, 1>}, {pipeline_mode = #tpu.pipeline_mode<synchronous>, transform_indices = @transform_5, window_bounds = array<i64: 2, 32>}, {pipeline_mode = #tpu.pipeline_mode<synchronous>, transform_indices = @transform_6, window_bounds = array<i64: 2, 1>}, {transform_indices = @transform_7, window_bounds = array<i64: 2, 256>}]} {
    %c0 = arith.constant 0 : index
    %c0_0 = arith.constant 0 : index
    %0 = vector.load %arg1[%c0, %c0_0] : memref<2x256xf32, #tpu.memory_space<vmem>>, vector<2x256xf32>
    %c0_1 = arith.constant 0 : index
    %c0_2 = arith.constant 0 : index
    %1 = vector.load %arg2[%c0_1, %c0_2] : memref<32x2xf32, #tpu.memory_space<vmem>>, vector<32x2xf32>
    %c0_3 = arith.constant 0 : index
    %c0_4 = arith.constant 0 : index
    %2 = vector.load %arg3[%c0_3, %c0_4] : memref<32x1xf32, #tpu.memory_space<vmem>>, vector<32x1xf32>
    %3 = vector.extract_strided_slice %1 {offsets = [0, 0], sizes = [32, 1], strides = [1, 1]} : vector<32x2xf32> to vector<32x1xf32>
    %4 = vector.extract_strided_slice %0 {offsets = [0, 0], sizes = [1, 256], strides = [1, 1]} : vector<2x256xf32> to vector<1x256xf32>
    %5 = vector.broadcast %3 : vector<32x1xf32> to vector<32x256xf32>
    %6 = vector.broadcast %4 : vector<1x256xf32> to vector<32x256xf32>
    %7 = arith.mulf %5, %6 : vector<32x256xf32>
    %8 = vector.broadcast %2 : vector<32x1xf32> to vector<32x256xf32>
    %9 = arith.addf %8, %7 : vector<32x256xf32>
    %10 = vector.extract_strided_slice %1 {offsets = [0, 1], sizes = [32, 1], strides = [1, 1]} : vector<32x2xf32> to vector<32x1xf32>
    %11 = vector.extract_strided_slice %0 {offsets = [1, 0], sizes = [1, 256], strides = [1, 1]} : vector<2x256xf32> to vector<1x256xf32>
    %12 = vector.broadcast %10 : vector<32x1xf32> to vector<32x256xf32>
    %13 = vector.broadcast %11 : vector<1x256xf32> to vector<32x256xf32>
    %14 = arith.mulf %12, %13 : vector<32x256xf32>
    %15 = arith.addf %9, %14 : vector<32x256xf32>
    %16 = math.tanh %15 : vector<32x256xf32>
    %c0_5 = arith.constant 0 : index
    %c0_6 = arith.constant 0 : index
    %17 = vector.load %arg4[%c0_5, %c0_6] : memref<32x32xf32, #tpu.memory_space<vmem>>, vector<32x32xf32>
    %cst = arith.constant dense<0.000000e+00> : vector<32x256xf32>
    %18 = tpu.matmul %17, %16, %cst {dimension_numbers = #tpu.dot_dimension_numbers<[1], [0], [0], [1], [0, 0, 1, 1], [], []>, precision = #tpu.contract_precision<fp32>} : vector<32x32xf32>, vector<32x256xf32>, vector<32x256xf32> -> vector<32x256xf32>
    %c0_7 = arith.constant 0 : index
    %c0_8 = arith.constant 0 : index
    %19 = vector.load %arg5[%c0_7, %c0_8] : memref<32x1xf32, #tpu.memory_space<vmem>>, vector<32x1xf32>
    %20 = vector.broadcast %19 : vector<32x1xf32> to vector<32x256xf32>
    %21 = arith.addf %18, %20 : vector<32x256xf32>
    %22 = math.tanh %21 : vector<32x256xf32>
    %c0_9 = arith.constant 0 : index
    %c0_10 = arith.constant 0 : index
    %23 = vector.load %arg6[%c0_9, %c0_10] : memref<2x32xf32, #tpu.memory_space<vmem>>, vector<2x32xf32>
    %cst_11 = arith.constant dense<0.000000e+00> : vector<2x256xf32>
    %24 = tpu.matmul %23, %22, %cst_11 {dimension_numbers = #tpu.dot_dimension_numbers<[1], [0], [0], [1], [0, 0, 1, 1], [], []>, precision = #tpu.contract_precision<fp32>} : vector<2x32xf32>, vector<32x256xf32>, vector<2x256xf32> -> vector<2x256xf32>
    %c0_12 = arith.constant 0 : index
    %c0_13 = arith.constant 0 : index
    %25 = vector.load %arg7[%c0_12, %c0_13] : memref<2x1xf32, #tpu.memory_space<vmem>>, vector<2x1xf32>
    %26 = vector.broadcast %25 : vector<2x1xf32> to vector<2x256xf32>
    %27 = arith.addf %24, %26 : vector<2x256xf32>
    %c0_14 = arith.constant 0 : index
    %c0_15 = arith.constant 0 : index
    %28 = vector.load %arg8[%c0_14, %c0_15] : memref<2x256xf32, #tpu.memory_space<vmem>>, vector<2x256xf32>
    tpu.vector_store %arg8[%c0_14, %c0_15], %27 {strides = array<i32>} : memref<2x256xf32, #tpu.memory_space<vmem>>, vector<2x256xf32>,
    return
  }
  func.func @transform_0(%arg0: i32) -> (i32, i32) {
    %c0_i32 = arith.constant 0 : i32
    %c0_i32_0 = arith.constant 0 : i32
    return %c0_i32, %arg0 : i32, i32
  }
  func.func @transform_1(%arg0: i32) -> (i32, i32) {
    %c0_i32 = arith.constant 0 : i32
    %c0_i32_0 = arith.constant 0 : i32
    %c0_i32_1 = arith.constant 0 : i32
    return %c0_i32, %c0_i32_0 : i32, i32
  }
  func.func @transform_2(%arg0: i32) -> (i32, i32) {
    %c0_i32 = arith.constant 0 : i32
    %c0_i32_0 = arith.constant 0 : i32
    %c0_i32_1 = arith.constant 0 : i32
    return %c0_i32, %c0_i32_0 : i32, i32
  }
  func.func @transform_3(%arg0: i32) -> (i32, i32) {
    %c0_i32 = arith.constant 0 : i32
    %c0_i32_0 = arith.constant 0 : i32
    %c0_i32_1 = arith.constant 0 : i32
    return %c0_i32, %c0_i32_0 : i32, i32
  }
  func.func @transform_4(%arg0: i32) -> (i32, i32) {
    %c0_i32 = arith.constant 0 : i32
    %c0_i32_0 = arith.constant 0 : i32
    %c0_i32_1 = arith.constant 0 : i32
    return %c0_i32, %c0_i32_0 : i32, i32
  }
  func.func @transform_5(%arg0: i32) -> (i32, i32) {
    %c0_i32 = arith.constant 0 : i32
    %c0_i32_0 = arith.constant 0 : i32
    %c0_i32_1 = arith.constant 0 : i32
    return %c0_i32, %c0_i32_0 : i32, i32
  }
  func.func @transform_6(%arg0: i32) -> (i32, i32) {
    %c0_i32 = arith.constant 0 : i32
    %c0_i32_0 = arith.constant 0 : i32
    %c0_i32_1 = arith.constant 0 : i32
    return %c0_i32, %c0_i32_0 : i32, i32
  }
  func.func @transform_7(%arg0: i32) -> (i32, i32) {
    %c0_i32 = arith.constant 0 : i32
    %c0_i32_0 = arith.constant 0 : i32
    return %c0_i32, %arg0 : i32, i32
  }
}

</mosaic_0001>

<llo_original>
// kernel: pinn_forward_dn.1
$region0: #{pinn_forward_dn.1}
  #allocation0 [shape = 'u32[]', space=smem, size = 0x4, offset = 0x4, fixed_abs, tag = 'smem constant byte address 0x4 - core index']
  #allocation1 [shape = 'u32[144,128]{1,0:T(1,128)}', space=vmem, size = 0x12000, scoped, tag = 'internal scratch']
  %s0 = inlined_call_operand.vmem [shape: f32[2,256], index: 0, kind: input, shape index: {}]
  %s1 = inlined_call_operand.vmem [shape: f32[32,2], index: 1, kind: input, shape index: {}]
  %s2 = inlined_call_operand.vmem [shape: f32[32,1], index: 2, kind: input, shape index: {}]
  %s3 = inlined_call_operand.vmem [shape: f32[32,32], index: 3, kind: input, shape index: {}]
  %s4 = inlined_call_operand.vmem [shape: f32[32,1], index: 4, kind: input, shape index: {}]
  %s5 = inlined_call_operand.vmem [shape: f32[2,32], index: 5, kind: input, shape index: {}]
  %s6 = inlined_call_operand.vmem [shape: f32[2,1], index: 6, kind: input, shape index: {}]
  %s7 = inlined_call_operand.hbm [shape: f32[2,256], index: 7, kind: output, shape index: {}]
  %s8 = sld [smem:[#allocation0]]
  $region38: #{pinn_forward_dn.1} parent=0
    _
  %s10 = ssub.s32 1, %s8
  %s11 = scalar_select 0, %s10, %s8
  $region1: #{pinn_forward_dn.1} parent=0
    #allocation2 [shape = 'u8[2048]{0}', space=vmem, size = 0x800, scoped, tag = 'output window, operand 0, single buffered']
    #allocation3 [shape = 's32[1]{0}', space=sflag, size = 0x4, scoped, tag = 'scoped memory for pinn_forward_dn.1']
    %12 = vsyncpa [#allocation3], 0
    // Predicated region
    $region2: #{pinn_forward_dn.1} parent=1 // pred_check
      _
    $region3: #{pinn_forward_dn.1} parent=1 // pred_check_branch
      %14 = sbr.rel (0) target = $region5
    $region4: #{pinn_forward_dn.1} parent=1 // pred_region
      _
    $region5: #{pinn_forward_dn.1} parent=1 // pred_fallthru
      _
    // Predicated region
    $region6: #{pinn_forward_dn.1} parent=1 // pred_check
      _
    $region7: #{pinn_forward_dn.1} parent=1 // pred_check_branch
      %16 = sbr.rel (0) target = $region9
    $region8: #{pinn_forward_dn.1} parent=1 // pred_region
      _
    $region9: #{pinn_forward_dn.1} parent=1 // pred_fallthru
      _
    // Predicated region
    $region10: #{pinn_forward_dn.1} parent=1 // pred_check
      _
    $region11: #{pinn_forward_dn.1} parent=1 // pred_check_branch
      %18 = sbr.rel (0) target = $region13
    $region12: #{pinn_forward_dn.1} parent=1 // pred_region
      _
    $region13: #{pinn_forward_dn.1} parent=1 // pred_fallthru
      _
    // Predicated region
    $region14: #{pinn_forward_dn.1} parent=1 // pred_check
      _
    $region15: #{pinn_forward_dn.1} parent=1 // pred_check_branch
      %20 = sbr.rel (0) target = $region17
    $region16: #{pinn_forward_dn.1} parent=1 // pred_region
      _
    $region17: #{pinn_forward_dn.1} parent=1 // pred_fallthru
      _
    // Predicated region
    $region18: #{pinn_forward_dn.1} parent=1 // pred_check
      _
    $region19: #{pinn_forward_dn.1} parent=1 // pred_check_branch
      %22 = sbr.rel (0) target = $region21
    $region20: #{pinn_forward_dn.1} parent=1 // pred_region
      _
    $region21: #{pinn_forward_dn.1} parent=1 // pred_fallthru
      _
    // Predicated region
    $region22: #{pinn_forward_dn.1} parent=1 // pred_check
      _
    $region23: #{pinn_forward_dn.1} parent=1 // pred_check_branch
      %24 = sbr.rel (0) target = $region25
    $region24: #{pinn_forward_dn.1} parent=1 // pred_region
      _
    $region25: #{pinn_forward_dn.1} parent=1 // pred_fallthru
      _
    // Predicated region
    $region26: #{pinn_forward_dn.1} parent=1 // pred_check
      _
    $region27: #{pinn_forward_dn.1} parent=1 // pred_check_branch
      %26 = sbr.rel (0) target = $region29
    $region28: #{pinn_forward_dn.1} parent=1 // pred_region
      _
    $region29: #{pinn_forward_dn.1} parent=1 // pred_fallthru
      _
    %v27 = vld [vmem:[%s0] sm:$0xf]
    %v28 = vld [vmem:[%s1] sm:$0xff]
    %v29 = vld [vmem:[%s1 + $0x8] sm:$0xff]
    %v30 = vld [vmem:[%s1 + $0x10] sm:$0xff]
    %v31 = vld [vmem:[%s1 + $0x18] sm:$0xff]
    %v32 = vld [vmem:[%s2] sm:$0xff]
    %v33 = vld [vmem:[%s2 + $0x8] sm:$0xff]
    %v34 = vld [vmem:[%s2 + $0x10] sm:$0xff]
    %v35 = vld [vmem:[%s2 + $0x18] sm:$0xff]
    %37 = vset.pattern.permute.xlu0 0
    %38 = vperm.xlu0 %37, %v28
    %v39 = vpop.permute.xlu0 %38
    %42 = vset.pattern.permute.xlu0 0
    %43 = vperm.xlu0 %42, %v29
    %v44 = vpop.permute.xlu0 %43
    %47 = vset.pattern.permute.xlu0 0
    %48 = vperm.xlu0 %47, %v30
    %v49 = vpop.permute.xlu0 %48
    %52 = vset.pattern.permute.xlu0 0
    %53 = vperm.xlu0 %52, %v31
    %v54 = vpop.permute.xlu0 %53
    %v57 = vlaneseq
    %v58 = vshrl.u32 %v57, 7
    %v59 = vsub.s32 0, %v58
    %v60 = vrot.slane %v27, %v59
    %v61 = vlaneseq
    %v62 = vshrl.u32 %v61, 7
    %v63 = vsub.s32 2, %v62
    %v64 = vrot.slane %v27, %v63
    %v67 = vlaneseq
    %v68 = vshrl.u32 %v67, 7
    %v69 = vsub.s32 0, %v68
    %v70 = vrot.slane %v60, %v69
    %v71 = vlaneseq
    %v72 = vshrl.u32 %v71, 7
    %v73 = vsub.s32 0, %v72
    %v74 = vrot.slane %v64, %v73
    %v75 = vmul.f32 %v39, %v70
    %v76 = vmul.f32 %v39, %v74
    %v77 = vmul.f32 %v44, %v70
    %v78 = vmul.f32 %v44, %v74
    %v79 = vmul.f32 %v49, %v70
    %v80 = vmul.f32 %v49, %v74
    %v81 = vmul.f32 %v54, %v70
    %v82 = vmul.f32 %v54, %v74
    %84 = vset.pattern.permute.xlu0 0
    %85 = vperm.xlu0 %84, %v32
    %v86 = vpop.permute.xlu0 %85
    %89 = vset.pattern.permute.xlu0 0
    %90 = vperm.xlu0 %89, %v33
    %v91 = vpop.permute.xlu0 %90
    %94 = vset.pattern.permute.xlu0 0
    %95 = vperm.xlu0 %94, %v34
    %v96 = vpop.permute.xlu0 %95
    %99 = vset.pattern.permute.xlu0 0
    %100 = vperm.xlu0 %99, %v35
    %v101 = vpop.permute.xlu0 %100
    %v103 = vadd.f32 %v86, %v75
    %v104 = vadd.f32 %v86, %v76
    %v105 = vadd.f32 %v91, %v77
    %v106 = vadd.f32 %v91, %v78
    %v107 = vadd.f32 %v96, %v79
    %v108 = vadd.f32 %v96, %v80
    %v109 = vadd.f32 %v101, %v81
    %v110 = vadd.f32 %v101, %v82
    %111 = vset.pattern.permute.xlu0 1
    %112 = vperm.xlu0 %111, %v28
    %v113 = vpop.permute.xlu0 %112
    %115 = vset.pattern.permute.xlu0 1
    %116 = vperm.xlu0 %115, %v29
    %v117 = vpop.permute.xlu0 %116
    %119 = vset.pattern.permute.xlu0 1
    %120 = vperm.xlu0 %119, %v30
    %v121 = vpop.permute.xlu0 %120
    %123 = vset.pattern.permute.xlu0 1
    %124 = vperm.xlu0 %123, %v31
    %v125 = vpop.permute.xlu0 %124
    %v127 = vlaneseq
    %v128 = vshrl.u32 %v127, 7
    %v129 = vsub.s32 1, %v128
    %v130 = vrot.slane %v27, %v129
    %v131 = vlaneseq
    %v132 = vshrl.u32 %v131, 7
    %v133 = vsub.s32 3, %v132
    %v134 = vrot.slane %v27, %v133
    %v137 = vlaneseq
    %v138 = vshrl.u32 %v137, 7
    %v139 = vsub.s32 1, %v138
    %v140 = vrot.slane %v130, %v139
    %v141 = vlaneseq
    %v142 = vshrl.u32 %v141, 7
    %v143 = vsub.s32 1, %v142
    %v144 = vrot.slane %v134, %v143
    %v145 = vmul.f32 %v113, %v140
    %v146 = vmul.f32 %v113, %v144
    %v147 = vmul.f32 %v117, %v140
    %v148 = vmul.f32 %v117, %v144
    %v149 = vmul.f32 %v121, %v140
    %v150 = vmul.f32 %v121, %v144
    %v151 = vmul.f32 %v125, %v140
    %v152 = vmul.f32 %v125, %v144
    %v153 = vadd.f32 %v103, %v145
    %v154 = vadd.f32 %v104, %v146
    %v155 = vadd.f32 %v105, %v147
    %v156 = vadd.f32 %v106, %v148
    %v157 = vadd.f32 %v107, %v149
    %v158 = vadd.f32 %v108, %v150
    %v159 = vadd.f32 %v109, %v151
    %v160 = vadd.f32 %v110, %v152
    %v161 = vtanh.pop %v153
    %v162 = vtanh.pop %v154
    %v163 = vtanh.pop %v155
    %v164 = vtanh.pop %v156
    %v165 = vtanh.pop %v157
    %v166 = vtanh.pop %v158
    %v167 = vtanh.pop %v159
    %v168 = vtanh.pop %v160
    %v169 = vld [vmem:[%s3] sm:$0xff]
    %v170 = vld [vmem:[%s3 + $0x8] sm:$0xff]
    %v171 = vld [vmem:[%s3 + $0x10] sm:$0xff]
    %v172 = vld [vmem:[%s3 + $0x18] sm:$0xff]
    %v173 = vld [vmem:[%s4] sm:$0xff]
    %v174 = vld [vmem:[%s4 + $0x8] sm:$0xff]
    %v175 = vld [vmem:[%s4 + $0x10] sm:$0xff]
    %v176 = vld [vmem:[%s4 + $0x18] sm:$0xff]
    %178 = vset.pattern.permute.xlu0 0
    %179 = vperm.xlu0 %178, %v173
    %v180 = vpop.permute.xlu0 %179
    %183 = vset.pattern.permute.xlu0 0
    %184 = vperm.xlu0 %183, %v174
    %v185 = vpop.permute.xlu0 %184
    %188 = vset.pattern.permute.xlu0 0
    %189 = vperm.xlu0 %188, %v175
    %v190 = vpop.permute.xlu0 %189
    %193 = vset.pattern.permute.xlu0 0
    %194 = vperm.xlu0 %193, %v176
    %v195 = vpop.permute.xlu0 %194
    %vm197 = vcmask 261120
    %v199 = vsel %vm197, %v169, 0
    %v202 = vsel %vm197, %v170, 0
    %v205 = vsel %vm197, %v171, 0
    %v208 = vsel %vm197, %v172, 0
    %v210 = vand.u32 %v162, 4294901760
    %211 = vmatprep.subr.mxu0 %v210
    %v212 = vand.u32 %v161, 4294901760
    %213 = vmatpush1.msra.mxu0 %v212
    %v214 = vand.u32 %v164, 4294901760
    %215 = vmatprep.subr.mxu0 %v214
    %v216 = vand.u32 %v163, 4294901760
    %217 = vmatpush1.msra.mxu0 %v216
    %v218 = vand.u32 %v166, 4294901760
    %219 = vmatprep.subr.mxu0 %v218
    %v220 = vand.u32 %v165, 4294901760
    %221 = vmatpush1.msra.mxu0 %v220
    %v222 = vand.u32 %v168, 4294901760
    %223 = vmatprep.subr.mxu0 %v222
    %v224 = vand.u32 %v167, 4294901760
    %225 = vmatpush1.msra.mxu0 %v224
    %226 = vmatprep.subr.mxu0 0.0
    %227 = vmatpush1.msra.mxu0 0.0
    %228 = vmatprep.subr.mxu0 0.0
    %229 = vmatpush1.msra.mxu0 0.0
    %230 = vmatprep.subr.mxu0 0.0
    %231 = vmatpush1.msra.mxu0 0.0
    %232 = vmatprep.subr.mxu0 0.0
    %233 = vmatpush1.msra.mxu0 0.0
    %234 = vmatprep.subr.mxu0 0.0
    %235 = vmatpush1.msra.mxu0 0.0
    %236 = vmatprep.subr.mxu0 0.0
    %237 = vmatpush1.msra.mxu0 0.0
    %238 = vmatprep.subr.mxu0 0.0
    %239 = vmatpush1.msra.mxu0 0.0
    %240 = vmatprep.subr.mxu0 0.0
    %241 = vmatpush1.msra.mxu0 0.0
    %242 = vmatprep.subr.mxu0 0.0
    %243 = vmatpush1.msra.mxu0 0.0
    %244 = vmatprep.subr.mxu0 0.0
    %245 = vmatpush1.msra.mxu0 0.0
    %246 = vmatprep.subr.mxu0 0.0
    %247 = vmatpush1.msra.mxu0 0.0
    %248 = vmatprep.subr.mxu0 0.0
    %249 = vmatpush1.msra.mxu0 0.0
    %250 = vmatprep.subr.mxu0 0.0
    %251 = vmatpush1.msra.mxu0 0.0
    %252 = vmatprep.subr.mxu0 0.0
    %253 = vmatpush1.msra.mxu0 0.0
    %254 = vmatprep.subr.mxu0 0.0
    %255 = vmatpush1.msra.mxu0 0.0
    %256 = vmatprep.subr.mxu0 0.0
    %257 = vmatpush1.msra.mxu0 0.0
    %258 = vmatprep.subr.mxu0 0.0
    %259 = vmatpush1.msra.mxu0 0.0
    %260 = vmatprep.subr.mxu0 0.0
    %261 = vmatpush1.msra.mxu0 0.0
    %262 = vmatprep.subr.mxu0 0.0
    %263 = vmatpush1.msra.mxu0 0.0
    %264 = vmatprep.subr.mxu0 0.0
    %265 = vmatpush1.msra.mxu0 0.0
    %266 = vmatprep.subr.mxu0 0.0
    %267 = vmatpush1.msra.mxu0 0.0
    %268 = vmatprep.subr.mxu0 0.0
    %269 = vmatpush1.msra.mxu0 0.0
    %270 = vmatprep.subr.mxu0 0.0
    %271 = vmatpush1.msra.mxu0 0.0
    %272 = vmatprep.subr.mxu0 0.0
    %273 = vmatpush1.msra.mxu0 0.0
    %274 = vmatprep.subr.mxu0 0.0
    %275 = vmatpush1.msra.mxu0 0.0
    %276 = vmatprep.subr.mxu0 0.0
    %277 = vmatpush1.msra.mxu0 0.0
    %278 = vmatprep.subr.mxu0 0.0
    %279 = vmatpush1.msra.mxu0 0.0
    %280 = vmatprep.subr.mxu0 0.0
    %281 = vmatpush1.msra.mxu0 0.0
    %282 = vmatprep.mubr.f32.mxu0 0.0
    %v283 = vand.u32 %v199, 4294901760
    %v284 = vsub.f32 %v199, %v283
    %v285 = vand.u32 %v284, 4294901760
    %v286 = vsub.f32 %v284, %v285
    %v287 = vand.u32 %v286, 4294901760
    %288 = vmatmul.mubr.f32.gmra.mrb[0].mxu0 %v287
    %v289 = vpop.f32.mrb[0].mxu0
    %v290 = vadd.f32 %v180, %v289
    %v291 = vpop.f32.mrb[0].mxu0
    %v292 = vadd.f32 %v180, %v291
    %293 = vmatprep.mubr.f32.mxu0 0.0
    %v294 = vand.u32 %v202, 4294901760
    %v295 = vsub.f32 %v202, %v294
    %v296 = vand.u32 %v295, 4294901760
    %v297 = vsub.f32 %v295, %v296
    %v298 = vand.u32 %v297, 4294901760
    %299 = vmatmul.mubr.f32.gmra.mrb[0].mxu0 %v298
    %v300 = vpop.f32.mrb[0].mxu0
    %v301 = vadd.f32 %v185, %v300
    %v302 = vpop.f32.mrb[0].mxu0
    %v303 = vadd.f32 %v185, %v302
    %304 = vmatprep.mubr.f32.mxu0 0.0
    %v305 = vand.u32 %v205, 4294901760
    %v306 = vsub.f32 %v205, %v305
    %v307 = vand.u32 %v306, 4294901760
    %v308 = vsub.f32 %v306, %v307
    %v309 = vand.u32 %v308, 4294901760
    %310 = vmatmul.mubr.f32.gmra.mrb[0].mxu0 %v309
    %v311 = vpop.f32.mrb[0].mxu0
    %v312 = vadd.f32 %v190, %v311
    %v313 = vpop.f32.mrb[0].mxu0
    %v314 = vadd.f32 %v190, %v313
    %315 = vmatprep.mubr.f32.mxu0 0.0
    %v316 = vand.u32 %v208, 4294901760
    %v317 = vsub.f32 %v208, %v316
    %v318 = vand.u32 %v317, 4294901760
    %v319 = vsub.f32 %v317, %v318
    %v320 = vand.u32 %v319, 4294901760
    %321 = vmatmul.mubr.f32.gmra.mrb[0].mxu0 %v320
    %v322 = vpop.f32.mrb[0].mxu0
    %v323 = vadd.f32 %v195, %v322
    %v324 = vpop.f32.mrb[0].mxu0
    %v325 = vadd.f32 %v195, %v324
    %326 = vdwg.mxu0
    %v327 = vand.u32 %v162, 4294901760
    %v328 = vsub.f32 %v162, %v327
    %v329 = vand.u32 %v328, 4294901760
    %v330 = vsub.f32 %v328, %v329
    %v331 = vand.u32 %v330, 4294901760
    %332 = vmatprep.subr.mxu0 %v331
    %v333 = vand.u32 %v161, 4294901760
    %v334 = vsub.f32 %v161, %v333
    %v335 = vand.u32 %v334, 4294901760
    %v336 = vsub.f32 %v334, %v335
    %v337 = vand.u32 %v336, 4294901760
    %338 = vmatpush1.msra.mxu0 %v337
    %v339 = vand.u32 %v164, 4294901760
    %v340 = vsub.f32 %v164, %v339
    %v341 = vand.u32 %v340, 4294901760
    %v342 = vsub.f32 %v340, %v341
    %v343 = vand.u32 %v342, 4294901760
    %344 = vmatprep.subr.mxu0 %v343
    %v345 = vand.u32 %v163, 4294901760
    %v346 = vsub.f32 %v163, %v345
    %v347 = vand.u32 %v346, 4294901760
    %v348 = vsub.f32 %v346, %v347
    %v349 = vand.u32 %v348, 4294901760
    %350 = vmatpush1.msra.mxu0 %v349
    %v351 = vand.u32 %v166, 4294901760
    %v352 = vsub.f32 %v166, %v351
    %v353 = vand.u32 %v352, 4294901760
    %v354 = vsub.f32 %v352, %v353
    %v355 = vand.u32 %v354, 4294901760
    %356 = vmatprep.subr.mxu0 %v355
    %v357 = vand.u32 %v165, 4294901760
    %v358 = vsub.f32 %v165, %v357
    %v359 = vand.u32 %v358, 4294901760
    %v360 = vsub.f32 %v358, %v359
    %v361 = vand.u32 %v360, 4294901760
    %362 = vmatpush1.msra.mxu0 %v361
    %v363 = vand.u32 %v168, 4294901760
    %v364 = vsub.f32 %v168, %v363
    %v365 = vand.u32 %v364, 4294901760
    %v366 = vsub.f32 %v364, %v365
    %v367 = vand.u32 %v366, 4294901760
    %368 = vmatprep.subr.mxu0 %v367
    %v369 = vand.u32 %v167, 4294901760
    %v370 = vsub.f32 %v167, %v369
    %v371 = vand.u32 %v370, 4294901760
    %v372 = vsub.f32 %v370, %v371
    %v373 = vand.u32 %v372, 4294901760
    %374 = vmatpush1.msra.mxu0 %v373
    %375 = vmatprep.subr.mxu0 0.0
    %376 = vmatpush1.msra.mxu0 0.0
    %377 = vmatprep.subr.mxu0 0.0
    %378 = vmatpush1.msra.mxu0 0.0
    %379 = vmatprep.subr.mxu0 0.0
    %380 = vmatpush1.msra.mxu0 0.0
    %381 = vmatprep.subr.mxu0 0.0
    %382 = vmatpush1.msra.mxu0 0.0
    %383 = vmatprep.subr.mxu0 0.0
    %384 = vmatpush1.msra.mxu0 0.0
    %385 = vmatprep.subr.mxu0 0.0
    %386 = vmatpush1.msra.mxu0 0.0
    %387 = vmatprep.subr.mxu0 0.0
    %388 = vmatpush1.msra.mxu0 0.0
    %389 = vmatprep.subr.mxu0 0.0
    %390 = vmatpush1.msra.mxu0 0.0
    %391 = vmatprep.subr.mxu0 0.0
    %392 = vmatpush1.msra.mxu0 0.0
    %393 = vmatprep.subr.mxu0 0.0
    %394 = vmatpush1.msra.mxu0 0.0
    %395 = vmatprep.subr.mxu0 0.0
    %396 = vmatpush1.msra.mxu0 0.0
    %397 = vmatprep.subr.mxu0 0.0
    %398 = vmatpush1.msra.mxu0 0.0
    %399 = vmatprep.subr.mxu0 0.0
    %400 = vmatpush1.msra.mxu0 0.0
    %401 = vmatprep.subr.mxu0 0.0
    %402 = vmatpush1.msra.mxu0 0.0
    %403 = vmatprep.subr.mxu0 0.0
    %404 = vmatpush1.msra.mxu0 0.0
    %405 = vmatprep.subr.mxu0 0.0
    %406 = vmatpush1.msra.mxu0 0.0
    %407 = vmatprep.subr.mxu0 0.0
    %408 = vmatpush1.msra.mxu0 0.0
    %409 = vmatprep.subr.mxu0 0.0
    %410 = vmatpush1.msra.mxu0 0.0
    %411 = vmatprep.subr.mxu0 0.0
    %412 = vmatpush1.msra.mxu0 0.0
    %413 = vmatprep.subr.mxu0 0.0
    %414 = vmatpush1.msra.mxu0 0.0
    %415 = vmatprep.subr.mxu0 0.0
    %416 = vmatpush1.msra.mxu0 0.0
    %417 = vmatprep.subr.mxu0 0.0
    %418 = vmatpush1.msra.mxu0 0.0
    %419 = vmatprep.subr.mxu0 0.0
    %420 = vmatpush1.msra.mxu0 0.0
    %421 = vmatprep.subr.mxu0 0.0
    %422 = vmatpush1.msra.mxu0 0.0
    %423 = vmatprep.subr.mxu0 0.0
    %424 = vmatpush1.msra.mxu0 0.0
    %425 = vmatprep.subr.mxu0 0.0
    %426 = vmatpush1.msra.mxu0 0.0
    %427 = vmatprep.subr.mxu0 0.0
    %428 = vmatpush1.msra.mxu0 0.0
    %429 = vmatprep.subr.mxu0 0.0
    %430 = vmatpush1.msra.mxu0 0.0
    %431 = vmatprep.mubr.f32.mxu0 0.0
    %v432 = vand.u32 %v199, 4294901760
    %433 = vmatmul.mubr.f32.gmra.mrb[0].mxu0 %v432
    %v434 = vpop.f32.mrb[0].mxu0
    %v435 = vadd.f32 %v290, %v434
    %v436 = vpop.f32.mrb[0].mxu0
    %v437 = vadd.f32 %v292, %v436
    %438 = vmatprep.mubr.f32.mxu0 0.0
    %v439 = vand.u32 %v202, 4294901760
    %440 = vmatmul.mubr.f32.gmra.mrb[0].mxu0 %v439
    %v441 = vpop.f32.mrb[0].mxu0
    %v442 = vadd.f32 %v301, %v441
    %v443 = vpop.f32.mrb[0].mxu0
    %v444 = vadd.f32 %v303, %v443
    %445 = vmatprep.mubr.f32.mxu0 0.0
    %v446 = vand.u32 %v205, 4294901760
    %447 = vmatmul.mubr.f32.gmra.mrb[0].mxu0 %v446
    %v448 = vpop.f32.mrb[0].mxu0
    %v449 = vadd.f32 %v312, %v448
    %v450 = vpop.f32.mrb[0].mxu0
    %v451 = vadd.f32 %v314, %v450
    %452 = vmatprep.mubr.f32.mxu0 0.0
    %v453 = vand.u32 %v208, 4294901760
    %454 = vmatmul.mubr.f32.gmra.mrb[0].mxu0 %v453
    %v455 = vpop.f32.mrb[0].mxu0
    %v456 = vadd.f32 %v323, %v455
    %v457 = vpop.f32.mrb[0].mxu0
    %v458 = vadd.f32 %v325, %v457
    %459 = vdwg.mxu0
    %v460 = vand.u32 %v162, 4294901760
    %v461 = vsub.f32 %v162, %v460
    %462 = vmatprep.subr.mxu0 %v461
    %v463 = vand.u32 %v161, 4294901760
    %v464 = vsub.f32 %v161, %v463
    %465 = vmatpush1.msra.mxu0 %v464
    %v466 = vand.u32 %v164, 4294901760
    %v467 = vsub.f32 %v164, %v466
    %468 = vmatprep.subr.mxu0 %v467
    %v469 = vand.u32 %v163, 4294901760
    %v470 = vsub.f32 %v163, %v469
    %471 = vmatpush1.msra.mxu0 %v470
    %v472 = vand.u32 %v166, 4294901760
    %v473 = vsub.f32 %v166, %v472
    %474 = vmatprep.subr.mxu0 %v473
    %v475 = vand.u32 %v165, 4294901760
    %v476 = vsub.f32 %v165, %v475
    %477 = vmatpush1.msra.mxu0 %v476
    %v478 = vand.u32 %v168, 4294901760
    %v479 = vsub.f32 %v168, %v478
    %480 = vmatprep.subr.mxu0 %v479
    %v481 = vand.u32 %v167, 4294901760
    %v482 = vsub.f32 %v167, %v481
    %483 = vmatpush1.msra.mxu0 %v482
    %484 = vmatprep.subr.mxu0 0.0
    %485 = vmatpush1.msra.mxu0 0.0
    %486 = vmatprep.subr.mxu0 0.0
    %487 = vmatpush1.msra.mxu0 0.0
    %488 = vmatprep.subr.mxu0 0.0
    %489 = vmatpush1.msra.mxu0 0.0
    %490 = vmatprep.subr.mxu0 0.0
    %491 = vmatpush1.msra.mxu0 0.0
    %492 = vmatprep.subr.mxu0 0.0
    %493 = vmatpush1.msra.mxu0 0.0
    %494 = vmatprep.subr.mxu0 0.0
    %495 = vmatpush1.msra.mxu0 0.0
    %496 = vmatprep.subr.mxu0 0.0
    %497 = vmatpush1.msra.mxu0 0.0
    %498 = vmatprep.subr.mxu0 0.0
    %499 = vmatpush1.msra.mxu0 0.0
    %500 = vmatprep.subr.mxu0 0.0
    %501 = vmatpush1.msra.mxu0 0.0
    %502 = vmatprep.subr.mxu0 0.0
    %503 = vmatpush1.msra.mxu0 0.0
    %504 = vmatprep.subr.mxu0 0.0
    %505 = vmatpush1.msra.mxu0 0.0
    %506 = vmatprep.subr.mxu0 0.0
    %507 = vmatpush1.msra.mxu0 0.0
    %508 = vmatprep.subr.mxu0 0.0
    %509 = vmatpush1.msra.mxu0 0.0
    %510 = vmatprep.subr.mxu0 0.0
    %511 = vmatpush1.msra.mxu0 0.0
    %512 = vmatprep.subr.mxu0 0.0
    %513 = vmatpush1.msra.mxu0 0.0
    %514 = vmatprep.subr.mxu0 0.0
    %515 = vmatpush1.msra.mxu0 0.0
    %516 = vmatprep.subr.mxu0 0.0
    %517 = vmatpush1.msra.mxu0 0.0
    %518 = vmatprep.subr.mxu0 0.0
    %519 = vmatpush1.msra.mxu0 0.0
    %520 = vmatprep.subr.mxu0 0.0
    %521 = vmatpush1.msra.mxu0 0.0
    %522 = vmatprep.subr.mxu0 0.0
    %523 = vmatpush1.msra.mxu0 0.0
    %524 = vmatprep.subr.mxu0 0.0
    %525 = vmatpush1.msra.mxu0 0.0
    %526 = vmatprep.subr.mxu0 0.0
    %527 = vmatpush1.msra.mxu0 0.0
    %528 = vmatprep.subr.mxu0 0.0
    %529 = vmatpush1.msra.mxu0 0.0
    %530 = vmatprep.subr.mxu0 0.0
    %531 = vmatpush1.msra.mxu0 0.0
    %532 = vmatprep.subr.mxu0 0.0
    %533 = vmatpush1.msra.mxu0 0.0
    %534 = vmatprep.subr.mxu0 0.0
    %535 = vmatpush1.msra.mxu0 0.0
    %536 = vmatprep.subr.mxu0 0.0
    %537 = vmatpush1.msra.mxu0 0.0
    %538 = vmatprep.subr.mxu0 0.0
    %539 = vmatpush1.msra.mxu0 0.0
    %540 = vmatprep.mubr.f32.mxu0 0.0
    %v541 = vand.u32 %v199, 4294901760
    %v542 = vsub.f32 %v199, %v541
    %543 = vmatmul.mubr.f32.gmra.mrb[0].mxu0 %v542
    %v544 = vpop.f32.mrb[0].mxu0
    %v545 = vadd.f32 %v435, %v544
    %v546 = vpop.f32.mrb[0].mxu0
    %v547 = vadd.f32 %v437, %v546
    %548 = vmatprep.mubr.f32.mxu0 0.0
    %v549 = vand.u32 %v202, 4294901760
    %v550 = vsub.f32 %v202, %v549
    %551 = vmatmul.mubr.f32.gmra.mrb[0].mxu0 %v550
    %v552 = vpop.f32.mrb[0].mxu0
    %v553 = vadd.f32 %v442, %v552
    %v554 = vpop.f32.mrb[0].mxu0
    %v555 = vadd.f32 %v444, %v554
    %556 = vmatprep.mubr.f32.mxu0 0.0
    %v557 = vand.u32 %v205, 4294901760
    %v558 = vsub.f32 %v205, %v557
    %559 = vmatmul.mubr.f32.gmra.mrb[0].mxu0 %v558
    %v560 = vpop.f32.mrb[0].mxu0
    %v561 = vadd.f32 %v449, %v560
    %v562 = vpop.f32.mrb[0].mxu0
    %v563 = vadd.f32 %v451, %v562
    %564 = vmatprep.mubr.f32.mxu0 0.0
    %v565 = vand.u32 %v208, 4294901760
    %v566 = vsub.f32 %v208, %v565
    %567 = vmatmul.mubr.f32.gmra.mrb[0].mxu0 %v566
    %v568 = vpop.f32.mrb[0].mxu0
    %v569 = vadd.f32 %v456, %v568
    %v570 = vpop.f32.mrb[0].mxu0
    %v571 = vadd.f32 %v458, %v570
    %572 = vdwg.mxu0
    %v573 = vand.u32 %v162, 4294901760
    %574 = vmatprep.subr.mxu0 %v573
    %v575 = vand.u32 %v161, 4294901760
    %576 = vmatpush1.msra.mxu0 %v575
    %v577 = vand.u32 %v164, 4294901760
    %578 = vmatprep.subr.mxu0 %v577
    %v579 = vand.u32 %v163, 4294901760
    %580 = vmatpush1.msra.mxu0 %v579
    %v581 = vand.u32 %v166, 4294901760
    %582 = vmatprep.subr.mxu0 %v581
    %v583 = vand.u32 %v165, 4294901760
    %584 = vmatpush1.msra.mxu0 %v583
    %v585 = vand.u32 %v168, 4294901760
    %586 = vmatprep.subr.mxu0 %v585
    %v587 = vand.u32 %v167, 4294901760
    %588 = vmatpush1.msra.mxu0 %v587
    %589 = vmatprep.subr.mxu0 0.0
    %590 = vmatpush1.msra.mxu0 0.0
    %591 = vmatprep.subr.mxu0 0.0
    %592 = vmatpush1.msra.mxu0 0.0
    %593 = vmatprep.subr.mxu0 0.0
    %594 = vmatpush1.msra.mxu0 0.0
    %595 = vmatprep.subr.mxu0 0.0
    %596 = vmatpush1.msra.mxu0 0.0
    %597 = vmatprep.subr.mxu0 0.0
    %598 = vmatpush1.msra.mxu0 0.0
    %599 = vmatprep.subr.mxu0 0.0
    %600 = vmatpush1.msra.mxu0 0.0
    %601 = vmatprep.subr.mxu0 0.0
    %602 = vmatpush1.msra.mxu0 0.0
    %603 = vmatprep.subr.mxu0 0.0
    %604 = vmatpush1.msra.mxu0 0.0
    %605 = vmatprep.subr.mxu0 0.0
    %606 = vmatpush1.msra.mxu0 0.0
    %607 = vmatprep.subr.mxu0 0.0
    %608 = vmatpush1.msra.mxu0 0.0
    %609 = vmatprep.subr.mxu0 0.0
    %610 = vmatpush1.msra.mxu0 0.0
    %611 = vmatprep.subr.mxu0 0.0
    %612 = vmatpush1.msra.mxu0 0.0
    %613 = vmatprep.subr.mxu0 0.0
    %614 = vmatpush1.msra.mxu0 0.0
    %615 = vmatprep.subr.mxu0 0.0
    %616 = vmatpush1.msra.mxu0 0.0
    %617 = vmatprep.subr.mxu0 0.0
    %618 = vmatpush1.msra.mxu0 0.0
    %619 = vmatprep.subr.mxu0 0.0
    %620 = vmatpush1.msra.mxu0 0.0
    %621 = vmatprep.subr.mxu0 0.0
    %622 = vmatpush1.msra.mxu0 0.0
    %623 = vmatprep.subr.mxu0 0.0
    %624 = vmatpush1.msra.mxu0 0.0
    %625 = vmatprep.subr.mxu0 0.0
    %626 = vmatpush1.msra.mxu0 0.0
    %627 = vmatprep.subr.mxu0 0.0
    %628 = vmatpush1.msra.mxu0 0.0
    %629 = vmatprep.subr.mxu0 0.0
    %630 = vmatpush1.msra.mxu0 0.0
    %631 = vmatprep.subr.mxu0 0.0
    %632 = vmatpush1.msra.mxu0 0.0
    %633 = vmatprep.subr.mxu0 0.0
    %634 = vmatpush1.msra.mxu0 0.0
    %635 = vmatprep.subr.mxu0 0.0
    %636 = vmatpush1.msra.mxu0 0.0
    %637 = vmatprep.subr.mxu0 0.0
    %638 = vmatpush1.msra.mxu0 0.0
    %639 = vmatprep.subr.mxu0 0.0
    %640 = vmatpush1.msra.mxu0 0.0
    %641 = vmatprep.subr.mxu0 0.0
    %642 = vmatpush1.msra.mxu0 0.0
    %643 = vmatprep.subr.mxu0 0.0
    %644 = vmatpush1.msra.mxu0 0.0
    %645 = vmatprep.mubr.f32.mxu0 0.0
    %v646 = vand.u32 %v199, 4294901760
    %v647 = vsub.f32 %v199, %v646
    %v648 = vand.u32 %v647, 4294901760
    %649 = vmatmul.mubr.f32.gmra.mrb[0].mxu0 %v648
    %v650 = vpop.f32.mrb[0].mxu0
    %v651 = vadd.f32 %v545, %v650
    %v652 = vpop.f32.mrb[0].mxu0
    %v653 = vadd.f32 %v547, %v652
    %654 = vmatprep.mubr.f32.mxu0 0.0
    %v655 = vand.u32 %v202, 4294901760
    %v656 = vsub.f32 %v202, %v655
    %v657 = vand.u32 %v656, 4294901760
    %658 = vmatmul.mubr.f32.gmra.mrb[0].mxu0 %v657
    %v659 = vpop.f32.mrb[0].mxu0
    %v660 = vadd.f32 %v553, %v659
    %v661 = vpop.f32.mrb[0].mxu0
    %v662 = vadd.f32 %v555, %v661
    %663 = vmatprep.mubr.f32.mxu0 0.0
    %v664 = vand.u32 %v205, 4294901760
    %v665 = vsub.f32 %v205, %v664
    %v666 = vand.u32 %v665, 4294901760
    %667 = vmatmul.mubr.f32.gmra.mrb[0].mxu0 %v666
    %v668 = vpop.f32.mrb[0].mxu0
    %v669 = vadd.f32 %v561, %v668
    %v670 = vpop.f32.mrb[0].mxu0
    %v671 = vadd.f32 %v563, %v670
    %672 = vmatprep.mubr.f32.mxu0 0.0
    %v673 = vand.u32 %v208, 4294901760
    %v674 = vsub.f32 %v208, %v673
    %v675 = vand.u32 %v674, 4294901760
    %676 = vmatmul.mubr.f32.gmra.mrb[0].mxu0 %v675
    %v677 = vpop.f32.mrb[0].mxu0
    %v678 = vadd.f32 %v569, %v677
    %v679 = vpop.f32.mrb[0].mxu0
    %v680 = vadd.f32 %v571, %v679
    %681 = vdwg.mxu0
    %v682 = vand.u32 %v162, 4294901760
    %v683 = vsub.f32 %v162, %v682
    %v684 = vand.u32 %v683, 4294901760
    %685 = vmatprep.subr.mxu0 %v684
    %v686 = vand.u32 %v161, 4294901760
    %v687 = vsub.f32 %v161, %v686
    %v688 = vand.u32 %v687, 4294901760
    %689 = vmatpush1.msra.mxu0 %v688
    %v690 = vand.u32 %v164, 4294901760
    %v691 = vsub.f32 %v164, %v690
    %v692 = vand.u32 %v691, 4294901760
    %693 = vmatprep.subr.mxu0 %v692
    %v694 = vand.u32 %v163, 4294901760
    %v695 = vsub.f32 %v163, %v694
    %v696 = vand.u32 %v695, 4294901760
    %697 = vmatpush1.msra.mxu0 %v696
    %v698 = vand.u32 %v166, 4294901760
    %v699 = vsub.f32 %v166, %v698
    %v700 = vand.u32 %v699, 4294901760
    %701 = vmatprep.subr.mxu0 %v700
    %v702 = vand.u32 %v165, 4294901760
    %v703 = vsub.f32 %v165, %v702
    %v704 = vand.u32 %v703, 4294901760
    %705 = vmatpush1.msra.mxu0 %v704
    %v706 = vand.u32 %v168, 4294901760
    %v707 = vsub.f32 %v168, %v706
    %v708 = vand.u32 %v707, 4294901760
    %709 = vmatprep.subr.mxu0 %v708
    %v710 = vand.u32 %v167, 4294901760
    %v711 = vsub.f32 %v167, %v710
    %v712 = vand.u32 %v711, 4294901760
    %713 = vmatpush1.msra.mxu0 %v712
    %714 = vmatprep.subr.mxu0 0.0
    %715 = vmatpush1.msra.mxu0 0.0
    %716 = vmatprep.subr.mxu0 0.0
    %717 = vmatpush1.msra.mxu0 0.0
    %718 = vmatprep.subr.mxu0 0.0
    %719 = vmatpush1.msra.mxu0 0.0
    %720 = vmatprep.subr.mxu0 0.0
    %721 = vmatpush1.msra.mxu0 0.0
    %722 = vmatprep.subr.mxu0 0.0
    %723 = vmatpush1.msra.mxu0 0.0
    %724 = vmatprep.subr.mxu0 0.0
    %725 = vmatpush1.msra.mxu0 0.0
    %726 = vmatprep.subr.mxu0 0.0
    %727 = vmatpush1.msra.mxu0 0.0
    %728 = vmatprep.subr.mxu0 0.0
    %729 = vmatpush1.msra.mxu0 0.0
    %730 = vmatprep.subr.mxu0 0.0
    %731 = vmatpush1.msra.mxu0 0.0
    %732 = vmatprep.subr.mxu0 0.0
    %733 = vmatpush1.msra.mxu0 0.0
    %734 = vmatprep.subr.mxu0 0.0
    %735 = vmatpush1.msra.mxu0 0.0
    %736 = vmatprep.subr.mxu0 0.0
    %737 = vmatpush1.msra.mxu0 0.0
    %738 = vmatprep.subr.mxu0 0.0
    %739 = vmatpush1.msra.mxu0 0.0
    %740 = vmatprep.subr.mxu0 0.0
    %741 = vmatpush1.msra.mxu0 0.0
    %742 = vmatprep.subr.mxu0 0.0
    %743 = vmatpush1.msra.mxu0 0.0
    %744 = vmatprep.subr.mxu0 0.0
    %745 = vmatpush1.msra.mxu0 0.0
    %746 = vmatprep.subr.mxu0 0.0
    %747 = vmatpush1.msra.mxu0 0.0
    %748 = vmatprep.subr.mxu0 0.0
    %749 = vmatpush1.msra.mxu0 0.0
    %750 = vmatprep.subr.mxu0 0.0
    %751 = vmatpush1.msra.mxu0 0.0
    %752 = vmatprep.subr.mxu0 0.0
    %753 = vmatpush1.msra.mxu0 0.0
    %754 = vmatprep.subr.mxu0 0.0
    %755 = vmatpush1.msra.mxu0 0.0
    %756 = vmatprep.subr.mxu0 0.0
    %757 = vmatpush1.msra.mxu0 0.0
    %758 = vmatprep.subr.mxu0 0.0
    %759 = vmatpush1.msra.mxu0 0.0
    %760 = vmatprep.subr.mxu0 0.0
    %761 = vmatpush1.msra.mxu0 0.0
    %762 = vmatprep.subr.mxu0 0.0
    %763 = vmatpush1.msra.mxu0 0.0
    %764 = vmatprep.subr.mxu0 0.0
    %765 = vmatpush1.msra.mxu0 0.0
    %766 = vmatprep.subr.mxu0 0.0
    %767 = vmatpush1.msra.mxu0 0.0
    %768 = vmatprep.subr.mxu0 0.0
    %769 = vmatpush1.msra.mxu0 0.0
    %770 = vmatprep.mubr.f32.mxu0 0.0
    %v771 = vand.u32 %v199, 4294901760
    %772 = vmatmul.mubr.f32.gmra.mrb[0].mxu0 %v771
    %v773 = vpop.f32.mrb[0].mxu0
    %v774 = vadd.f32 %v651, %v773
    %v775 = vpop.f32.mrb[0].mxu0
    %v776 = vadd.f32 %v653, %v775
    %777 = vmatprep.mubr.f32.mxu0 0.0
    %v778 = vand.u32 %v202, 4294901760
    %779 = vmatmul.mubr.f32.gmra.mrb[0].mxu0 %v778
    %v780 = vpop.f32.mrb[0].mxu0
    %v781 = vadd.f32 %v660, %v780
    %v782 = vpop.f32.mrb[0].mxu0
    %v783 = vadd.f32 %v662, %v782
    %784 = vmatprep.mubr.f32.mxu0 0.0
    %v785 = vand.u32 %v205, 4294901760
    %786 = vmatmul.mubr.f32.gmra.mrb[0].mxu0 %v785
    %v787 = vpop.f32.mrb[0].mxu0
    %v788 = vadd.f32 %v669, %v787
    %v789 = vpop.f32.mrb[0].mxu0
    %v790 = vadd.f32 %v671, %v789
    %791 = vmatprep.mubr.f32.mxu0 0.0
    %v792 = vand.u32 %v208, 4294901760
    %793 = vmatmul.mubr.f32.gmra.mrb[0].mxu0 %v792
    %v794 = vpop.f32.mrb[0].mxu0
    %v795 = vadd.f32 %v678, %v794
    %v796 = vpop.f32.mrb[0].mxu0
    %v797 = vadd.f32 %v680, %v796
    %798 = vdwg.mxu0
    %v799 = vand.u32 %v162, 4294901760
    %800 = vmatprep.subr.mxu0 %v799
    %v801 = vand.u32 %v161, 4294901760
    %802 = vmatpush1.msra.mxu0 %v801
    %v803 = vand.u32 %v164, 4294901760
    %804 = vmatprep.subr.mxu0 %v803
    %v805 = vand.u32 %v163, 4294901760
    %806 = vmatpush1.msra.mxu0 %v805
    %v807 = vand.u32 %v166, 4294901760
    %808 = vmatprep.subr.mxu0 %v807
    %v809 = vand.u32 %v165, 4294901760
    %810 = vmatpush1.msra.mxu0 %v809
    %v811 = vand.u32 %v168, 4294901760
    %812 = vmatprep.subr.mxu0 %v811
    %v813 = vand.u32 %v167, 4294901760
    %814 = vmatpush1.msra.mxu0 %v813
    %815 = vmatprep.subr.mxu0 0.0
    %816 = vmatpush1.msra.mxu0 0.0
    %817 = vmatprep.subr.mxu0 0.0
    %818 = vmatpush1.msra.mxu0 0.0
    %819 = vmatprep.subr.mxu0 0.0
    %820 = vmatpush1.msra.mxu0 0.0
    %821 = vmatprep.subr.mxu0 0.0
    %822 = vmatpush1.msra.mxu0 0.0
    %823 = vmatprep.subr.mxu0 0.0
    %824 = vmatpush1.msra.mxu0 0.0
    %825 = vmatprep.subr.mxu0 0.0
    %826 = vmatpush1.msra.mxu0 0.0
    %827 = vmatprep.subr.mxu0 0.0
    %828 = vmatpush1.msra.mxu0 0.0
    %829 = vmatprep.subr.mxu0 0.0
    %830 = vmatpush1.msra.mxu0 0.0
    %831 = vmatprep.subr.mxu0 0.0
    %832 = vmatpush1.msra.mxu0 0.0
    %833 = vmatprep.subr.mxu0 0.0
    %834 = vmatpush1.msra.mxu0 0.0
    %835 = vmatprep.subr.mxu0 0.0
    %836 = vmatpush1.msra.mxu0 0.0
    %837 = vmatprep.subr.mxu0 0.0
    %838 = vmatpush1.msra.mxu0 0.0
    %839 = vmatprep.subr.mxu0 0.0
    %840 = vmatpush1.msra.mxu0 0.0
    %841 = vmatprep.subr.mxu0 0.0
    %842 = vmatpush1.msra.mxu0 0.0
    %843 = vmatprep.subr.mxu0 0.0
    %844 = vmatpush1.msra.mxu0 0.0
    %845 = vmatprep.subr.mxu0 0.0
    %846 = vmatpush1.msra.mxu0 0.0
    %847 = vmatprep.subr.mxu0 0.0
    %848 = vmatpush1.msra.mxu0 0.0
    %849 = vmatprep.subr.mxu0 0.0
    %850 = vmatpush1.msra.mxu0 0.0
    %851 = vmatprep.subr.mxu0 0.0
    %852 = vmatpush1.msra.mxu0 0.0
    %853 = vmatprep.subr.mxu0 0.0
    %854 = vmatpush1.msra.mxu0 0.0
    %855 = vmatprep.subr.mxu0 0.0
    %856 = vmatpush1.msra.mxu0 0.0
    %857 = vmatprep.subr.mxu0 0.0
    %858 = vmatpush1.msra.mxu0 0.0
    %859 = vmatprep.subr.mxu0 0.0
    %860 = vmatpush1.msra.mxu0 0.0
    %861 = vmatprep.subr.mxu0 0.0
    %862 = vmatpush1.msra.mxu0 0.0
    %863 = vmatprep.subr.mxu0 0.0
    %864 = vmatpush1.msra.mxu0 0.0
    %865 = vmatprep.subr.mxu0 0.0
    %866 = vmatpush1.msra.mxu0 0.0
    %867 = vmatprep.subr.mxu0 0.0
    %868 = vmatpush1.msra.mxu0 0.0
    %869 = vmatprep.subr.mxu0 0.0
    %870 = vmatpush1.msra.mxu0 0.0
    %871 = vmatprep.mubr.f32.mxu0 0.0
    %v872 = vand.u32 %v199, 4294901760
    %873 = vmatmul.mubr.f32.gmra.mrb[0].mxu0 %v872
    %v874 = vpop.f32.mrb[0].mxu0
    %v875 = vadd.f32 %v774, %v874
    %v876 = vpop.f32.mrb[0].mxu0
    %v877 = vadd.f32 %v776, %v876
    %878 = vmatprep.mubr.f32.mxu0 0.0
    %v879 = vand.u32 %v202, 4294901760
    %880 = vmatmul.mubr.f32.gmra.mrb[0].mxu0 %v879
    %v881 = vpop.f32.mrb[0].mxu0
    %v882 = vadd.f32 %v781, %v881
    %v883 = vpop.f32.mrb[0].mxu0
    %v884 = vadd.f32 %v783, %v883
    %885 = vmatprep.mubr.f32.mxu0 0.0
    %v886 = vand.u32 %v205, 4294901760
    %887 = vmatmul.mubr.f32.gmra.mrb[0].mxu0 %v886
    %v888 = vpop.f32.mrb[0].mxu0
    %v889 = vadd.f32 %v788, %v888
    %v890 = vpop.f32.mrb[0].mxu0
    %v891 = vadd.f32 %v790, %v890
    %892 = vmatprep.mubr.f32.mxu0 0.0
    %v893 = vand.u32 %v208, 4294901760
    %894 = vmatmul.mubr.f32.gmra.mrb[0].mxu0 %v893
    %v895 = vpop.f32.mrb[0].mxu0
    %v896 = vadd.f32 %v795, %v895
    %v897 = vpop.f32.mrb[0].mxu0
    %v898 = vadd.f32 %v797, %v897
    %899 = vdwg.mxu0
    %v900 = vtanh.pop %v875
    %v901 = vtanh.pop %v877
    %v902 = vtanh.pop %v882
    %v903 = vtanh.pop %v884
    %v904 = vtanh.pop %v889
    %v905 = vtanh.pop %v891
    %v906 = vtanh.pop %v896
    %v907 = vtanh.pop %v898
    %v908 = vld [vmem:[%s5] sm:$0x3]
    %v909 = vld [vmem:[%s6] sm:$0x3]
    %911 = vset.pattern.permute.xlu0 0
    %912 = vperm.xlu0 %911, %v909
    %v913 = vpop.permute.xlu0 %912
    %v916 = vsel %vm197, %v908, 0
    %v918 = vand.u32 %v901, 4294901760
    %919 = vmatprep.subr.mxu0 %v918
    %v920 = vand.u32 %v900, 4294901760
    %921 = vmatpush1.msra.mxu0 %v920
    %v922 = vand.u32 %v903, 4294901760
    %923 = vmatprep.subr.mxu0 %v922
    %v924 = vand.u32 %v902, 4294901760
    %925 = vmatpush1.msra.mxu0 %v924
    %v926 = vand.u32 %v905, 4294901760
    %927 = vmatprep.subr.mxu0 %v926
    %v928 = vand.u32 %v904, 4294901760
    %929 = vmatpush1.msra.mxu0 %v928
    %v930 = vand.u32 %v907, 4294901760
    %931 = vmatprep.subr.mxu0 %v930
    %v932 = vand.u32 %v906, 4294901760
    %933 = vmatpush1.msra.mxu0 %v932
    %934 = vmatprep.subr.mxu0 0.0
    %935 = vmatpush1.msra.mxu0 0.0
    %936 = vmatprep.subr.mxu0 0.0
    %937 = vmatpush1.msra.mxu0 0.0
    %938 = vmatprep.subr.mxu0 0.0
    %939 = vmatpush1.msra.mxu0 0.0
    %940 = vmatprep.subr.mxu0 0.0
    %941 = vmatpush1.msra.mxu0 0.0
    %942 = vmatprep.subr.mxu0 0.0
    %943 = vmatpush1.msra.mxu0 0.0
    %944 = vmatprep.subr.mxu0 0.0
    %945 = vmatpush1.msra.mxu0 0.0
    %946 = vmatprep.subr.mxu0 0.0
    %947 = vmatpush1.msra.mxu0 0.0
    %948 = vmatprep.subr.mxu0 0.0
    %949 = vmatpush1.msra.mxu0 0.0
    %950 = vmatprep.subr.mxu0 0.0
    %951 = vmatpush1.msra.mxu0 0.0
    %952 = vmatprep.subr.mxu0 0.0
    %953 = vmatpush1.msra.mxu0 0.0
    %954 = vmatprep.subr.mxu0 0.0
    %955 = vmatpush1.msra.mxu0 0.0
    %956 = vmatprep.subr.mxu0 0.0
    %957 = vmatpush1.msra.mxu0 0.0
    %958 = vmatprep.subr.mxu0 0.0
    %959 = vmatpush1.msra.mxu0 0.0
    %960 = vmatprep.subr.mxu0 0.0
    %961 = vmatpush1.msra.mxu0 0.0
    %962 = vmatprep.subr.mxu0 0.0
    %963 = vmatpush1.msra.mxu0 0.0
    %964 = vmatprep.subr.mxu0 0.0
    %965 = vmatpush1.msra.mxu0 0.0
    %966 = vmatprep.subr.mxu0 0.0
    %967 = vmatpush1.msra.mxu0 0.0
    %968 = vmatprep.subr.mxu0 0.0
    %969 = vmatpush1.msra.mxu0 0.0
    %970 = vmatprep.subr.mxu0 0.0
    %971 = vmatpush1.msra.mxu0 0.0
    %972 = vmatprep.subr.mxu0 0.0
    %973 = vmatpush1.msra.mxu0 0.0
    %974 = vmatprep.subr.mxu0 0.0
    %975 = vmatpush1.msra.mxu0 0.0
    %976 = vmatprep.subr.mxu0 0.0
    %977 = vmatpush1.msra.mxu0 0.0
    %978 = vmatprep.subr.mxu0 0.0
    %979 = vmatpush1.msra.mxu0 0.0
    %980 = vmatprep.subr.mxu0 0.0
    %981 = vmatpush1.msra.mxu0 0.0
    %982 = vmatprep.subr.mxu0 0.0
    %983 = vmatpush1.msra.mxu0 0.0
    %984 = vmatprep.subr.mxu0 0.0
    %985 = vmatpush1.msra.mxu0 0.0
    %986 = vmatprep.subr.mxu0 0.0
    %987 = vmatpush1.msra.mxu0 0.0
    %988 = vmatprep.subr.mxu0 0.0
    %989 = vmatpush1.msra.mxu0 0.0
    %990 = vmatprep.mubr.f32.mxu0 0.0
    %v991 = vand.u32 %v916, 4294901760
    %v992 = vsub.f32 %v916, %v991
    %v993 = vand.u32 %v992, 4294901760
    %v994 = vsub.f32 %v992, %v993
    %v995 = vand.u32 %v994, 4294901760
    %996 = vmatmul.mubr.f32.gmra.mrb[0].mxu0 %v995
    %v997 = vpop.f32.mrb[0].mxu0
    %v998 = vadd.f32 %v913, %v997
    %v999 = vpop.f32.mrb[0].mxu0
    %v1000 = vadd.f32 %v913, %v999
    %1001 = vdwg.mxu0
    %v1002 = vand.u32 %v901, 4294901760
    %v1003 = vsub.f32 %v901, %v1002
    %v1004 = vand.u32 %v1003, 4294901760
    %v1005 = vsub.f32 %v1003, %v1004
    %v1006 = vand.u32 %v1005, 4294901760
    %1007 = vmatprep.subr.mxu0 %v1006
    %v1008 = vand.u32 %v900, 4294901760
    %v1009 = vsub.f32 %v900, %v1008
    %v1010 = vand.u32 %v1009, 4294901760
    %v1011 = vsub.f32 %v1009, %v1010
    %v1012 = vand.u32 %v1011, 4294901760
    %1013 = vmatpush1.msra.mxu0 %v1012
    %v1014 = vand.u32 %v903, 4294901760
    %v1015 = vsub.f32 %v903, %v1014
    %v1016 = vand.u32 %v1015, 4294901760
    %v1017 = vsub.f32 %v1015, %v1016
    %v1018 = vand.u32 %v1017, 4294901760
    %1019 = vmatprep.subr.mxu0 %v1018
    %v1020 = vand.u32 %v902, 4294901760
    %v1021 = vsub.f32 %v902, %v1020
    %v1022 = vand.u32 %v1021, 4294901760
    %v1023 = vsub.f32 %v1021, %v1022
    %v1024 = vand.u32 %v1023, 4294901760
    %1025 = vmatpush1.msra.mxu0 %v1024
    %v1026 = vand.u32 %v905, 4294901760
    %v1027 = vsub.f32 %v905, %v1026
    %v1028 = vand.u32 %v1027, 4294901760
    %v1029 = vsub.f32 %v1027, %v1028
    %v1030 = vand.u32 %v1029, 4294901760
    %1031 = vmatprep.subr.mxu0 %v1030
    %v1032 = vand.u32 %v904, 4294901760
    %v1033 = vsub.f32 %v904, %v1032
    %v1034 = vand.u32 %v1033, 4294901760
    %v1035 = vsub.f32 %v1033, %v1034
    %v1036 = vand.u32 %v1035, 4294901760
    %1037 = vmatpush1.msra.mxu0 %v1036
    %v1038 = vand.u32 %v907, 4294901760
    %v1039 = vsub.f32 %v907, %v1038
    %v1040 = vand.u32 %v1039, 4294901760
    %v1041 = vsub.f32 %v1039, %v1040
    %v1042 = vand.u32 %v1041, 4294901760
    %1043 = vmatprep.subr.mxu0 %v1042
    %v1044 = vand.u32 %v906, 4294901760
    %v1045 = vsub.f32 %v906, %v1044
    %v1046 = vand.u32 %v1045, 4294901760
    %v1047 = vsub.f32 %v1045, %v1046
    %v1048 = vand.u32 %v1047, 4294901760
    %1049 = vmatpush1.msra.mxu0 %v1048
    %1050 = vmatprep.subr.mxu0 0.0
    %1051 = vmatpush1.msra.mxu0 0.0
    %1052 = vmatprep.subr.mxu0 0.0
    %1053 = vmatpush1.msra.mxu0 0.0
    %1054 = vmatprep.subr.mxu0 0.0
    %1055 = vmatpush1.msra.mxu0 0.0
    %1056 = vmatprep.subr.mxu0 0.0
    %1057 = vmatpush1.msra.mxu0 0.0
    %1058 = vmatprep.subr.mxu0 0.0
    %1059 = vmatpush1.msra.mxu0 0.0
    %1060 = vmatprep.subr.mxu0 0.0
    %1061 = vmatpush1.msra.mxu0 0.0
    %1062 = vmatprep.subr.mxu0 0.0
    %1063 = vmatpush1.msra.mxu0 0.0
    %1064 = vmatprep.subr.mxu0 0.0
    %1065 = vmatpush1.msra.mxu0 0.0
    %1066 = vmatprep.subr.mxu0 0.0
    %1067 = vmatpush1.msra.mxu0 0.0
    %1068 = vmatprep.subr.mxu0 0.0
    %1069 = vmatpush1.msra.mxu0 0.0
    %1070 = vmatprep.subr.mxu0 0.0
    %1071 = vmatpush1.msra.mxu0 0.0
    %1072 = vmatprep.subr.mxu0 0.0
    %1073 = vmatpush1.msra.mxu0 0.0
    %1074 = vmatprep.subr.mxu0 0.0
    %1075 = vmatpush1.msra.mxu0 0.0
    %1076 = vmatprep.subr.mxu0 0.0
    %1077 = vmatpush1.msra.mxu0 0.0
    %1078 = vmatprep.subr.mxu0 0.0
    %1079 = vmatpush1.msra.mxu0 0.0
    %1080 = vmatprep.subr.mxu0 0.0
    %1081 = vmatpush1.msra.mxu0 0.0
    %1082 = vmatprep.subr.mxu0 0.0
    %1083 = vmatpush1.msra.mxu0 0.0
    %1084 = vmatprep.subr.mxu0 0.0
    %1085 = vmatpush1.msra.mxu0 0.0
    %1086 = vmatprep.subr.mxu0 0.0
    %1087 = vmatpush1.msra.mxu0 0.0
    %1088 = vmatprep.subr.mxu0 0.0
    %1089 = vmatpush1.msra.mxu0 0.0
    %1090 = vmatprep.subr.mxu0 0.0
    %1091 = vmatpush1.msra.mxu0 0.0
    %1092 = vmatprep.subr.mxu0 0.0
    %1093 = vmatpush1.msra.mxu0 0.0
    %1094 = vmatprep.subr.mxu0 0.0
    %1095 = vmatpush1.msra.mxu0 0.0
    %1096 = vmatprep.subr.mxu0 0.0
    %1097 = vmatpush1.msra.mxu0 0.0
    %1098 = vmatprep.subr.mxu0 0.0
    %1099 = vmatpush1.msra.mxu0 0.0
    %1100 = vmatprep.subr.mxu0 0.0
    %1101 = vmatpush1.msra.mxu0 0.0
    %1102 = vmatprep.subr.mxu0 0.0
    %1103 = vmatpush1.msra.mxu0 0.0
    %1104 = vmatprep.subr.mxu0 0.0
    %1105 = vmatpush1.msra.mxu0 0.0
    %1106 = vmatprep.mubr.f32.mxu0 0.0
    %v1107 = vand.u32 %v916, 4294901760
    %1108 = vmatmul.mubr.f32.gmra.mrb[0].mxu0 %v1107
    %v1109 = vpop.f32.mrb[0].mxu0
    %v1110 = vadd.f32 %v998, %v1109
    %v1111 = vpop.f32.mrb[0].mxu0
    %v1112 = vadd.f32 %v1000, %v1111
    %1113 = vdwg.mxu0
    %v1114 = vand.u32 %v901, 4294901760
    %v1115 = vsub.f32 %v901, %v1114
    %1116 = vmatprep.subr.mxu0 %v1115
    %v1117 = vand.u32 %v900, 4294901760
    %v1118 = vsub.f32 %v900, %v1117
    %1119 = vmatpush1.msra.mxu0 %v1118
    %v1120 = vand.u32 %v903, 4294901760
    %v1121 = vsub.f32 %v903, %v1120
    %1122 = vmatprep.subr.mxu0 %v1121
    %v1123 = vand.u32 %v902, 4294901760
    %v1124 = vsub.f32 %v902, %v1123
    %1125 = vmatpush1.msra.mxu0 %v1124
    %v1126 = vand.u32 %v905, 4294901760
    %v1127 = vsub.f32 %v905, %v1126
    %1128 = vmatprep.subr.mxu0 %v1127
    %v1129 = vand.u32 %v904, 4294901760
    %v1130 = vsub.f32 %v904, %v1129
    %1131 = vmatpush1.msra.mxu0 %v1130
    %v1132 = vand.u32 %v907, 4294901760
    %v1133 = vsub.f32 %v907, %v1132
    %1134 = vmatprep.subr.mxu0 %v1133
    %v1135 = vand.u32 %v906, 4294901760
    %v1136 = vsub.f32 %v906, %v1135
    %1137 = vmatpush1.msra.mxu0 %v1136
    %1138 = vmatprep.subr.mxu0 0.0
    %1139 = vmatpush1.msra.mxu0 0.0
    %1140 = vmatprep.subr.mxu0 0.0
    %1141 = vmatpush1.msra.mxu0 0.0
    %1142 = vmatprep.subr.mxu0 0.0
    %1143 = vmatpush1.msra.mxu0 0.0
    %1144 = vmatprep.subr.mxu0 0.0
    %1145 = vmatpush1.msra.mxu0 0.0
    %1146 = vmatprep.subr.mxu0 0.0
    %1147 = vmatpush1.msra.mxu0 0.0
    %1148 = vmatprep.subr.mxu0 0.0
    %1149 = vmatpush1.msra.mxu0 0.0
    %1150 = vmatprep.subr.mxu0 0.0
    %1151 = vmatpush1.msra.mxu0 0.0
    %1152 = vmatprep.subr.mxu0 0.0
    %1153 = vmatpush1.msra.mxu0 0.0
    %1154 = vmatprep.subr.mxu0 0.0
    %1155 = vmatpush1.msra.mxu0 0.0
    %1156 = vmatprep.subr.mxu0 0.0
    %1157 = vmatpush1.msra.mxu0 0.0
    %1158 = vmatprep.subr.mxu0 0.0
    %1159 = vmatpush1.msra.mxu0 0.0
    %1160 = vmatprep.subr.mxu0 0.0
    %1161 = vmatpush1.msra.mxu0 0.0
    %1162 = vmatprep.subr.mxu0 0.0
    %1163 = vmatpush1.msra.mxu0 0.0
    %1164 = vmatprep.subr.mxu0 0.0
    %1165 = vmatpush1.msra.mxu0 0.0
    %1166 = vmatprep.subr.mxu0 0.0
    %1167 = vmatpush1.msra.mxu0 0.0
    %1168 = vmatprep.subr.mxu0 0.0
    %1169 = vmatpush1.msra.mxu0 0.0
    %1170 = vmatprep.subr.mxu0 0.0
    %1171 = vmatpush1.msra.mxu0 0.0
    %1172 = vmatprep.subr.mxu0 0.0
    %1173 = vmatpush1.msra.mxu0 0.0
    %1174 = vmatprep.subr.mxu0 0.0
    %1175 = vmatpush1.msra.mxu0 0.0
    %1176 = vmatprep.subr.mxu0 0.0
    %1177 = vmatpush1.msra.mxu0 0.0
    %1178 = vmatprep.subr.mxu0 0.0
    %1179 = vmatpush1.msra.mxu0 0.0
    %1180 = vmatprep.subr.mxu0 0.0
    %1181 = vmatpush1.msra.mxu0 0.0
    %1182 = vmatprep.subr.mxu0 0.0
    %1183 = vmatpush1.msra.mxu0 0.0
    %1184 = vmatprep.subr.mxu0 0.0
    %1185 = vmatpush1.msra.mxu0 0.0
    %1186 = vmatprep.subr.mxu0 0.0
    %1187 = vmatpush1.msra.mxu0 0.0
    %1188 = vmatprep.subr.mxu0 0.0
    %1189 = vmatpush1.msra.mxu0 0.0
    %1190 = vmatprep.subr.mxu0 0.0
    %1191 = vmatpush1.msra.mxu0 0.0
    %1192 = vmatprep.subr.mxu0 0.0
    %1193 = vmatpush1.msra.mxu0 0.0
    %1194 = vmatprep.mubr.f32.mxu0 0.0
    %v1195 = vand.u32 %v916, 4294901760
    %v1196 = vsub.f32 %v916, %v1195
    %1197 = vmatmul.mubr.f32.gmra.mrb[0].mxu0 %v1196
    %v1198 = vpop.f32.mrb[0].mxu0
    %v1199 = vadd.f32 %v1110, %v1198
    %v1200 = vpop.f32.mrb[0].mxu0
    %v1201 = vadd.f32 %v1112, %v1200
    %1202 = vdwg.mxu0
    %v1203 = vand.u32 %v901, 4294901760
    %1204 = vmatprep.subr.mxu0 %v1203
    %v1205 = vand.u32 %v900, 4294901760
    %1206 = vmatpush1.msra.mxu0 %v1205
    %v1207 = vand.u32 %v903, 4294901760
    %1208 = vmatprep.subr.mxu0 %v1207
    %v1209 = vand.u32 %v902, 4294901760
    %1210 = vmatpush1.msra.mxu0 %v1209
    %v1211 = vand.u32 %v905, 4294901760
    %1212 = vmatprep.subr.mxu0 %v1211
    %v1213 = vand.u32 %v904, 4294901760
    %1214 = vmatpush1.msra.mxu0 %v1213
    %v1215 = vand.u32 %v907, 4294901760
    %1216 = vmatprep.subr.mxu0 %v1215
    %v1217 = vand.u32 %v906, 4294901760
    %1218 = vmatpush1.msra.mxu0 %v1217
    %1219 = vmatprep.subr.mxu0 0.0
    %1220 = vmatpush1.msra.mxu0 0.0
    %1221 = vmatprep.subr.mxu0 0.0
    %1222 = vmatpush1.msra.mxu0 0.0
    %1223 = vmatprep.subr.mxu0 0.0
    %1224 = vmatpush1.msra.mxu0 0.0
    %1225 = vmatprep.subr.mxu0 0.0
    %1226 = vmatpush1.msra.mxu0 0.0
    %1227 = vmatprep.subr.mxu0 0.0
    %1228 = vmatpush1.msra.mxu0 0.0
    %1229 = vmatprep.subr.mxu0 0.0
    %1230 = vmatpush1.msra.mxu0 0.0
    %1231 = vmatprep.subr.mxu0 0.0
    %1232 = vmatpush1.msra.mxu0 0.0
    %1233 = vmatprep.subr.mxu0 0.0
    %1234 = vmatpush1.msra.mxu0 0.0
    %1235 = vmatprep.subr.mxu0 0.0
    %1236 = vmatpush1.msra.mxu0 0.0
    %1237 = vmatprep.subr.mxu0 0.0
    %1238 = vmatpush1.msra.mxu0 0.0
    %1239 = vmatprep.subr.mxu0 0.0
    %1240 = vmatpush1.msra.mxu0 0.0
    %1241 = vmatprep.subr.mxu0 0.0
    %1242 = vmatpush1.msra.mxu0 0.0
    %1243 = vmatprep.subr.mxu0 0.0
    %1244 = vmatpush1.msra.mxu0 0.0
    %1245 = vmatprep.subr.mxu0 0.0
    %1246 = vmatpush1.msra.mxu0 0.0
    %1247 = vmatprep.subr.mxu0 0.0
    %1248 = vmatpush1.msra.mxu0 0.0
    %1249 = vmatprep.subr.mxu0 0.0
    %1250 = vmatpush1.msra.mxu0 0.0
    %1251 = vmatprep.subr.mxu0 0.0
    %1252 = vmatpush1.msra.mxu0 0.0
    %1253 = vmatprep.subr.mxu0 0.0
    %1254 = vmatpush1.msra.mxu0 0.0
    %1255 = vmatprep.subr.mxu0 0.0
    %1256 = vmatpush1.msra.mxu0 0.0
    %1257 = vmatprep.subr.mxu0 0.0
    %1258 = vmatpush1.msra.mxu0 0.0
    %1259 = vmatprep.subr.mxu0 0.0
    %1260 = vmatpush1.msra.mxu0 0.0
    %1261 = vmatprep.subr.mxu0 0.0
    %1262 = vmatpush1.msra.mxu0 0.0
    %1263 = vmatprep.subr.mxu0 0.0
    %1264 = vmatpush1.msra.mxu0 0.0
    %1265 = vmatprep.subr.mxu0 0.0
    %1266 = vmatpush1.msra.mxu0 0.0
    %1267 = vmatprep.subr.mxu0 0.0
    %1268 = vmatpush1.msra.mxu0 0.0
    %1269 = vmatprep.subr.mxu0 0.0
    %1270 = vmatpush1.msra.mxu0 0.0
    %1271 = vmatprep.subr.mxu0 0.0
    %1272 = vmatpush1.msra.mxu0 0.0
    %1273 = vmatprep.subr.mxu0 0.0
    %1274 = vmatpush1.msra.mxu0 0.0
    %1275 = vmatprep.mubr.f32.mxu0 0.0
    %v1276 = vand.u32 %v916, 4294901760
    %v1277 = vsub.f32 %v916, %v1276
    %v1278 = vand.u32 %v1277, 4294901760
    %1279 = vmatmul.mubr.f32.gmra.mrb[0].mxu0 %v1278
    %v1280 = vpop.f32.mrb[0].mxu0
    %v1281 = vadd.f32 %v1199, %v1280
    %v1282 = vpop.f32.mrb[0].mxu0
    %v1283 = vadd.f32 %v1201, %v1282
    %1284 = vdwg.mxu0
    %v1285 = vand.u32 %v901, 4294901760
    %v1286 = vsub.f32 %v901, %v1285
    %v1287 = vand.u32 %v1286, 4294901760
    %1288 = vmatprep.subr.mxu0 %v1287
    %v1289 = vand.u32 %v900, 4294901760
    %v1290 = vsub.f32 %v900, %v1289
    %v1291 = vand.u32 %v1290, 4294901760
    %1292 = vmatpush1.msra.mxu0 %v1291
    %v1293 = vand.u32 %v903, 4294901760
    %v1294 = vsub.f32 %v903, %v1293
    %v1295 = vand.u32 %v1294, 4294901760
    %1296 = vmatprep.subr.mxu0 %v1295
    %v1297 = vand.u32 %v902, 4294901760
    %v1298 = vsub.f32 %v902, %v1297
    %v1299 = vand.u32 %v1298, 4294901760
    %1300 = vmatpush1.msra.mxu0 %v1299
    %v1301 = vand.u32 %v905, 4294901760
    %v1302 = vsub.f32 %v905, %v1301
    %v1303 = vand.u32 %v1302, 4294901760
    %1304 = vmatprep.subr.mxu0 %v1303
    %v1305 = vand.u32 %v904, 4294901760
    %v1306 = vsub.f32 %v904, %v1305
    %v1307 = vand.u32 %v1306, 4294901760
    %1308 = vmatpush1.msra.mxu0 %v1307
    %v1309 = vand.u32 %v907, 4294901760
    %v1310 = vsub.f32 %v907, %v1309
    %v1311 = vand.u32 %v1310, 4294901760
    %1312 = vmatprep.subr.mxu0 %v1311
    %v1313 = vand.u32 %v906, 4294901760
    %v1314 = vsub.f32 %v906, %v1313
    %v1315 = vand.u32 %v1314, 4294901760
    %1316 = vmatpush1.msra.mxu0 %v1315
    %1317 = vmatprep.subr.mxu0 0.0
    %1318 = vmatpush1.msra.mxu0 0.0
    %1319 = vmatprep.subr.mxu0 0.0
    %1320 = vmatpush1.msra.mxu0 0.0
    %1321 = vmatprep.subr.mxu0 0.0
    %1322 = vmatpush1.msra.mxu0 0.0
    %1323 = vmatprep.subr.mxu0 0.0
    %1324 = vmatpush1.msra.mxu0 0.0
    %1325 = vmatprep.subr.mxu0 0.0
    %1326 = vmatpush1.msra.mxu0 0.0
    %1327 = vmatprep.subr.mxu0 0.0
    %1328 = vmatpush1.msra.mxu0 0.0
    %1329 = vmatprep.subr.mxu0 0.0
    %1330 = vmatpush1.msra.mxu0 0.0
    %1331 = vmatprep.subr.mxu0 0.0
    %1332 = vmatpush1.msra.mxu0 0.0
    %1333 = vmatprep.subr.mxu0 0.0
    %1334 = vmatpush1.msra.mxu0 0.0
    %1335 = vmatprep.subr.mxu0 0.0
    %1336 = vmatpush1.msra.mxu0 0.0
    %1337 = vmatprep.subr.mxu0 0.0
    %1338 = vmatpush1.msra.mxu0 0.0
    %1339 = vmatprep.subr.mxu0 0.0
    %1340 = vmatpush1.msra.mxu0 0.0
    %1341 = vmatprep.subr.mxu0 0.0
    %1342 = vmatpush1.msra.mxu0 0.0
    %1343 = vmatprep.subr.mxu0 0.0
    %1344 = vmatpush1.msra.mxu0 0.0
    %1345 = vmatprep.subr.mxu0 0.0
    %1346 = vmatpush1.msra.mxu0 0.0
    %1347 = vmatprep.subr.mxu0 0.0
    %1348 = vmatpush1.msra.mxu0 0.0
    %1349 = vmatprep.subr.mxu0 0.0
    %1350 = vmatpush1.msra.mxu0 0.0
    %1351 = vmatprep.subr.mxu0 0.0
    %1352 = vmatpush1.msra.mxu0 0.0
    %1353 = vmatprep.subr.mxu0 0.0
    %1354 = vmatpush1.msra.mxu0 0.0
    %1355 = vmatprep.subr.mxu0 0.0
    %1356 = vmatpush1.msra.mxu0 0.0
    %1357 = vmatprep.subr.mxu0 0.0
    %1358 = vmatpush1.msra.mxu0 0.0
    %1359 = vmatprep.subr.mxu0 0.0
    %1360 = vmatpush1.msra.mxu0 0.0
    %1361 = vmatprep.subr.mxu0 0.0
    %1362 = vmatpush1.msra.mxu0 0.0
    %1363 = vmatprep.subr.mxu0 0.0
    %1364 = vmatpush1.msra.mxu0 0.0
    %1365 = vmatprep.subr.mxu0 0.0
    %1366 = vmatpush1.msra.mxu0 0.0
    %1367 = vmatprep.subr.mxu0 0.0
    %1368 = vmatpush1.msra.mxu0 0.0
    %1369 = vmatprep.subr.mxu0 0.0
    %1370 = vmatpush1.msra.mxu0 0.0
    %1371 = vmatprep.subr.mxu0 0.0
    %1372 = vmatpush1.msra.mxu0 0.0
    %1373 = vmatprep.mubr.f32.mxu0 0.0
    %v1374 = vand.u32 %v916, 4294901760
    %1375 = vmatmul.mubr.f32.gmra.mrb[0].mxu0 %v1374
    %v1376 = vpop.f32.mrb[0].mxu0
    %v1377 = vadd.f32 %v1281, %v1376
    %v1378 = vpop.f32.mrb[0].mxu0
    %v1379 = vadd.f32 %v1283, %v1378
    %1380 = vdwg.mxu0
    %v1381 = vand.u32 %v901, 4294901760
    %1382 = vmatprep.subr.mxu0 %v1381
    %v1383 = vand.u32 %v900, 4294901760
    %1384 = vmatpush1.msra.mxu0 %v1383
    %v1385 = vand.u32 %v903, 4294901760
    %1386 = vmatprep.subr.mxu0 %v1385
    %v1387 = vand.u32 %v902, 4294901760
    %1388 = vmatpush1.msra.mxu0 %v1387
    %v1389 = vand.u32 %v905, 4294901760
    %1390 = vmatprep.subr.mxu0 %v1389
    %v1391 = vand.u32 %v904, 4294901760
    %1392 = vmatpush1.msra.mxu0 %v1391
    %v1393 = vand.u32 %v907, 4294901760
    %1394 = vmatprep.subr.mxu0 %v1393
    %v1395 = vand.u32 %v906, 4294901760
    %1396 = vmatpush1.msra.mxu0 %v1395
    %1397 = vmatprep.subr.mxu0 0.0
    %1398 = vmatpush1.msra.mxu0 0.0
    %1399 = vmatprep.subr.mxu0 0.0
    %1400 = vmatpush1.msra.mxu0 0.0
    %1401 = vmatprep.subr.mxu0 0.0
    %1402 = vmatpush1.msra.mxu0 0.0
    %1403 = vmatprep.subr.mxu0 0.0
    %1404 = vmatpush1.msra.mxu0 0.0
    %1405 = vmatprep.subr.mxu0 0.0
    %1406 = vmatpush1.msra.mxu0 0.0
    %1407 = vmatprep.subr.mxu0 0.0
    %1408 = vmatpush1.msra.mxu0 0.0
    %1409 = vmatprep.subr.mxu0 0.0
    %1410 = vmatpush1.msra.mxu0 0.0
    %1411 = vmatprep.subr.mxu0 0.0
    %1412 = vmatpush1.msra.mxu0 0.0
    %1413 = vmatprep.subr.mxu0 0.0
    %1414 = vmatpush1.msra.mxu0 0.0
    %1415 = vmatprep.subr.mxu0 0.0
    %1416 = vmatpush1.msra.mxu0 0.0
    %1417 = vmatprep.subr.mxu0 0.0
    %1418 = vmatpush1.msra.mxu0 0.0
    %1419 = vmatprep.subr.mxu0 0.0
    %1420 = vmatpush1.msra.mxu0 0.0
    %1421 = vmatprep.subr.mxu0 0.0
    %1422 = vmatpush1.msra.mxu0 0.0
    %1423 = vmatprep.subr.mxu0 0.0
    %1424 = vmatpush1.msra.mxu0 0.0
    %1425 = vmatprep.subr.mxu0 0.0
    %1426 = vmatpush1.msra.mxu0 0.0
    %1427 = vmatprep.subr.mxu0 0.0
    %1428 = vmatpush1.msra.mxu0 0.0
    %1429 = vmatprep.subr.mxu0 0.0
    %1430 = vmatpush1.msra.mxu0 0.0
    %1431 = vmatprep.subr.mxu0 0.0
    %1432 = vmatpush1.msra.mxu0 0.0
    %1433 = vmatprep.subr.mxu0 0.0
    %1434 = vmatpush1.msra.mxu0 0.0
    %1435 = vmatprep.subr.mxu0 0.0
    %1436 = vmatpush1.msra.mxu0 0.0
    %1437 = vmatprep.subr.mxu0 0.0
    %1438 = vmatpush1.msra.mxu0 0.0
    %1439 = vmatprep.subr.mxu0 0.0
    %1440 = vmatpush1.msra.mxu0 0.0
    %1441 = vmatprep.subr.mxu0 0.0
    %1442 = vmatpush1.msra.mxu0 0.0
    %1443 = vmatprep.subr.mxu0 0.0
    %1444 = vmatpush1.msra.mxu0 0.0
    %1445 = vmatprep.subr.mxu0 0.0
    %1446 = vmatpush1.msra.mxu0 0.0
    %1447 = vmatprep.subr.mxu0 0.0
    %1448 = vmatpush1.msra.mxu0 0.0
    %1449 = vmatprep.subr.mxu0 0.0
    %1450 = vmatpush1.msra.mxu0 0.0
    %1451 = vmatprep.subr.mxu0 0.0
    %1452 = vmatpush1.msra.mxu0 0.0
    %1453 = vmatprep.mubr.f32.mxu0 0.0
    %v1454 = vand.u32 %v916, 4294901760
    %1455 = vmatmul.mubr.f32.gmra.mrb[0].mxu0 %v1454
    %v1456 = vpop.f32.mrb[0].mxu0
    %v1457 = vadd.f32 %v1377, %v1456
    %v1458 = vpop.f32.mrb[0].mxu0
    %v1459 = vadd.f32 %v1379, %v1458
    %1460 = vdwg.mxu0
    %v1463 = vcombine.low %v1457, %v1459
    %v1465 = vunpack.c.l.s4 1983009808
    %v1466 = vunpack.c.0.s8 %v1465
    %v1467 = vlaneseq
    %v1468 = vshrl.u32 %v1467, 7
    %v1469 = vsub.s32 %v1466, %v1468
    %v1470 = vrot.slane %v1463, %v1469
    %1472 = vst [vmem:[#allocation2] sm:$0xf] %v1470
    // Predicated region
    $region30: #{pinn_forward_dn.1} parent=1 // pred_check
      _
    $region31: #{pinn_forward_dn.1} parent=1 // pred_check_branch
      %1474 = sbr.rel (0) target = $region33
    $region32: #{pinn_forward_dn.1} parent=1 // pred_region
      %s1476 = ssub.s32 64, 64
      %1477 = vsyncadd [#allocation3], %s1476
      %s1479 = sshll.u32 [#allocation2], 4
      %s1480 = int_to_ptr.vmem [resolvable:$true] %s1479
      %1482 = dma.vmem_to_hbm [thread:$0]  %s1480, 64, %s7, [#allocation3]
    $region33: #{pinn_forward_dn.1} parent=1 // pred_fallthru
      _
    // Predicated region
    $region34: #{pinn_forward_dn.1} parent=1 // pred_check
      _
    $region35: #{pinn_forward_dn.1} parent=1 // pred_check_branch
      %1484 = sbr.rel (0) target = $region37
    $region36: #{pinn_forward_dn.1} parent=1 // pred_region
      %1485 = dma.done [#allocation3], 64
    $region37: #{pinn_forward_dn.1} parent=1 // pred_fallthru
      _
    %1486 = vsyncpa [#allocation3], 1

</llo_original>
